<compile_context>
chip_gen: v6e
topology: v6e:2x2x1
jax: 0.10.0
libtpu: 0.0.40
codegen_flags: <defaults>
</compile_context>

<pallas_src>
import functools
import math

import jax
import jax.numpy as jnp
from jax.experimental import pallas as pl
from jax.experimental.pallas import tpu as pltpu


def _round_up(n, m):
    return ((n + m - 1) // m) * m


# ---------------------------------------------------------------------------
# Fused Pallas kernel: all BasicBlocks + final fc for one batch tile.
# ---------------------------------------------------------------------------
def _danet_fused_kernel(x_ref, wx_ref, bx_ref, w1r_ref, b1r_ref, wf_ref, bf_ref,
                        out_ref):
    x = x_ref[...]                                   # (TB, F_in) bf16
    dp = wf_ref.shape[0]                             # padded hidden width (128)
    num_rest = w1r_ref.shape[0]                      # layer_num

    # Single wide MXU pass over raw x: init conv1 pre-activation + all (L+1)
    # identity branches.  The concatenated bias is broadcast-added once.
    all_x = (jnp.dot(x, wx_ref[...], preferred_element_type=jnp.float32)
             + bx_ref[...])                          # (TB, (L+2)*dp) f32
    # column layout of all_x:
    #   [0       : dp      ]  init-block conv1 (mask folded)
    #   [(l+1)*dp:(l+2)*dp ]  identity branch of block l  (l = 0 is init block)

    def leaky_relu(s):                               # PyTorch default slope 0.01
        return jnp.where(s >= 0.0, s, 0.01 * s)

    # Init block.
    out = leaky_relu(jnp.maximum(all_x[:, :dp], 0.0) + all_x[:, dp:2 * dp])

    # Remaining blocks, statically unrolled (layer_num is small); the activation
    # stays on-chip the whole time.
    for l in range(num_rest):
        h = (jnp.dot(out.astype(jnp.bfloat16), w1r_ref[l],
                     preferred_element_type=jnp.float32) + b1r_ref[l])
        out = leaky_relu(jnp.maximum(h, 0.0)
                         + all_x[:, (l + 2) * dp:(l + 3) * dp])

    # Final fc: lane-dense (128-wide) unmasked store; wrapper slices to num_classes.
    out_ref[...] = (jnp.dot(out.astype(jnp.bfloat16), wf_ref[...],
                            preferred_element_type=jnp.float32)
                    + bf_ref[...]).astype(out_ref.dtype)


# ---------------------------------------------------------------------------
# Wrapper: batch-tiled grid, weights resident across grid steps.
# ---------------------------------------------------------------------------
@functools.partial(jax.jit, static_argnames=("num_classes", "tb"))
def danet_forward(x, packed, *, num_classes, tb=128):
    """Fused DANet forward.  x: (B, fix_input_dim) float32."""
    b, f_in = x.shape
    cp = packed["wf"].shape[1]

    # Batch tile: multiple of 8 sublanes; pad the batch so every tile is full.
    tb_eff = min(tb, _round_up(b, 8))
    b_pad = _round_up(b, tb_eff)
    x_p = jnp.pad(x, ((0, b_pad - b), (0, 0))).astype(jnp.bfloat16)

    weights = (packed["wx_cat"], packed["bx_cat"],
               packed["w1r"], packed["b1r"], packed["wf"], packed["bf"])

    def resident(a):  # full-extent spec: stays in VMEM across all grid steps
        return pl.BlockSpec(a.shape, lambda i, n=a.ndim: (0,) * n)

    out = pl.pallas_call(
        _danet_fused_kernel,
        out_shape=jax.ShapeDtypeStruct((b_pad, cp), jnp.float32),
        grid=(b_pad // tb_eff,),
        in_specs=[pl.BlockSpec((tb_eff, f_in), lambda i: (i, 0))]
                 + [resident(a) for a in weights],
        out_specs=pl.BlockSpec((tb_eff, cp), lambda i: (i, 0)),
        compiler_params=pltpu.CompilerParams(
            dimension_semantics=("parallel",),   # shards batch tiles across v7x's 2 TCs
        ),
    )(x_p, *weights)
    return out[:b, :num_classes]


# ---------------------------------------------------------------------------
# Deterministic parameters mirroring the PyTorch module (forward-used tensors only).
# ---------------------------------------------------------------------------
def make_danet_params(key, fix_input_dim, base_outdim, num_classes, layer_num):
    keys = jax.random.split(key, 3 * (layer_num + 1) + 1)
    ki = iter(range(len(keys)))

    def lin(k, i, o):
        kw, kb = jax.random.split(k)
        bound = 1.0 / math.sqrt(i)
        w = jax.random.uniform(kw, (i, o), jnp.float32, -bound, bound)
        b = jax.random.uniform(kb, (o,), jnp.float32, -bound, bound)
        return w, b

    def fixed_mask(k, n):
        num_masked = int(n * 0.1)
        perm = jax.random.permutation(k, n)
        return jnp.zeros((n,), jnp.float32).at[perm[:num_masked]].set(1.0)

    raw = {}
    w1, b1 = lin(keys[next(ki)], fix_input_dim, base_outdim)
    wd, bd = lin(keys[next(ki)], fix_input_dim, base_outdim)
    mask = fixed_mask(keys[next(ki)], fix_input_dim)
    raw["init"] = dict(w1=w1, b1=b1, wd=wd, bd=bd, mask=mask)

    raw["layers"] = []
    for _ in range(layer_num):
        w1, b1 = lin(keys[next(ki)], base_outdim, base_outdim)
        wd, bd = lin(keys[next(ki)], fix_input_dim, base_outdim)
        mask = fixed_mask(keys[next(ki)], base_outdim)
        raw["layers"].append(dict(w1=w1, b1=b1, wd=wd, bd=bd, mask=mask))

    wf, bf = lin(keys[next(ki)], base_outdim, num_classes)
    raw["fc"] = dict(w=wf, b=bf)
    return raw


def pack_danet_params(raw, lane=128):
    """Fold fixed masks into conv1, concat all x-consumers into one lane-dense
    matrix, pad all lane dims to 128, cast matmul weights to bf16 (biases f32)."""
    assert len(raw["layers"]) >= 1, "pack assumes layer_num >= 1"
    f_in, d = raw["init"]["w1"].shape
    c = raw["fc"]["w"].shape[1]
    dp, cp = _round_up(d, lane), _round_up(c, lane)

    def fold(w1, b1, mask):
        # masked_fill(pre, mask, 1e-6) @ W1 + b1
        #   == pre @ (W1 * (1-mask)[:,None]) + ((1e-6*mask) @ W1 + b1)
        return w1 * (1.0 - mask)[:, None], b1 + (1e-6 * mask) @ w1

    def pad2(a, rows, cols):
        return jnp.pad(a, ((0, rows - a.shape[0]), (0, cols - a.shape[1])))

    # Everything that reads raw x, concatenated along the lane axis:
    #   [ init conv1 (mask folded) | downsample_init | downsample_1 | ... ]
    w1i, b1i = fold(raw["init"]["w1"], raw["init"]["b1"], raw["init"]["mask"])
    wx, bx = [pad2(w1i, f_in, dp)], [pad2(b1i[None, :], 1, dp)]
    for p in [raw["init"]] + raw["layers"]:
        wx.append(pad2(p["wd"], f_in, dp))
        bx.append(pad2(p["bd"][None, :], 1, dp))
    wx_cat = jnp.concatenate(wx, axis=1).astype(jnp.bfloat16)   # (F_in, (L+2)*dp)
    bx_cat = jnp.concatenate(bx, axis=1)                        # (1, (L+2)*dp) f32

    # conv1 of the remaining L blocks (act on the dp-padded activation; padded
    # rows/cols are zero so the padding region stays exactly zero through all layers).
    w1r, b1r = [], []
    for p in raw["layers"]:
        w, b = fold(p["w1"], p["b1"], p["mask"])
        w1r.append(pad2(w, dp, dp))
        b1r.append(pad2(b[None, :], 1, dp))
    w1r = jnp.stack(w1r).astype(jnp.bfloat16)                    # (L, dp, dp)
    b1r = jnp.stack(b1r)                                         # (L, 1, dp) f32

    wf = pad2(raw["fc"]["w"], dp, cp).astype(jnp.bfloat16)
    bf = pad2(raw["fc"]["b"][None, :], 1, cp)

    return dict(wx_cat=wx_cat, bx_cat=bx_cat, w1r=w1r, b1r=b1r, wf=wf, bf=bf)


# ---------------------------------------------------------------------------
# Pure-JAX f32 reference (unfused, unfolded) for a tolerance check.
# ---------------------------------------------------------------------------
def danet_reference(x, raw):
    def block(xx, pre, p):
        masked = jnp.where(p["mask"] > 0.5, jnp.float32(1e-6), pre)
        h = jnp.maximum(masked @ p["w1"] + p["b1"], 0.0)
        identity = xx @ p["wd"] + p["bd"]
        s = h + identity
        return jnp.where(s >= 0.0, s, 0.01 * s)

    out = block(x, x, raw["init"])
    for p in raw["layers"]:
        out = block(x, out, p)
    return out @ raw["fc"]["w"] + raw["fc"]["b"]


# ---------------------------------------------------------------------------
if __name__ == "__main__":
    batch = 256            # 2 batch tiles of 128 rows
    fix_input_dim = 16     # raw tabular feature dim
    base_outdim = 32       # hidden width (padded to 128 lanes in-kernel)
    num_classes = 4        # padded to 128 lanes in-kernel, sliced in wrapper
    layer_num = 2

    key = jax.random.PRNGKey(0)
    k_x, k_p = jax.random.split(key)
    x = jax.random.normal(k_x, (batch, fix_input_dim), jnp.float32)

    raw = make_danet_params(k_p, fix_input_dim, base_outdim, num_classes, layer_num)
    packed = pack_danet_params(raw)

    out = danet_forward(x, packed, num_classes=num_classes, tb=128)
    jax.block_until_ready(out)
    assert out.shape == (batch, num_classes), out.shape

    # Tolerance check vs. the unfused f32 reference (kernel uses bf16 MXU inputs,
    # f32 accumulation) — verifies the mask-fold / concat / padding are exact transforms.
    ref = danet_reference(x, raw)
    max_err = float(jnp.max(jnp.abs(out - ref)))
    assert max_err < 0.1, max_err

    # Dropout (declared, never applied in forward) and conv2 (never called) are
    # intentionally omitted; cal_loss is training-only and out of scope.
    print("KERNEL_OK")
</pallas_src>

<mosaic_0001>
module attributes {stable_mosaic.version = 11 : i64} {
  func.func @_danet_fused_kernel(%arg0: i32, %arg1: memref<128x16xbf16, #tpu.memory_space<vmem>>, %arg2: memref<16x512xbf16, #tpu.memory_space<vmem>>, %arg3: memref<1x512xf32, #tpu.memory_space<vmem>>, %arg4: memref<2x128x128xbf16, #tpu.memory_space<vmem>>, %arg5: memref<2x1x128xf32, #tpu.memory_space<vmem>>, %arg6: memref<128x128xbf16, #tpu.memory_space<vmem>>, %arg7: memref<1x128xf32, #tpu.memory_space<vmem>>, %arg8: memref<128x128xf32, #tpu.memory_space<vmem>>) attributes {dimension_semantics = [#tpu.dimension_semantics<parallel>], iteration_bounds = array<i64: 2>, scalar_prefetch = 0 : i64, scratch_operands = 0 : i64, tpu.core_type = #tpu.core_type<tc>, window_params = [{transform_indices = @transform_0, window_bounds = array<i64: 128, 16>}, {pipeline_mode = #tpu.pipeline_mode<synchronous>, transform_indices = @transform_1, window_bounds = array<i64: 16, 512>}, {pipeline_mode = #tpu.pipeline_mode<synchronous>, transform_indices = @transform_2, window_bounds = array<i64: 1, 512>}, {pipeline_mode = #tpu.pipeline_mode<synchronous>, transform_indices = @transform_3, window_bounds = array<i64: 2, 128, 128>}, {pipeline_mode = #tpu.pipeline_mode<synchronous>, transform_indices = @transform_4, window_bounds = array<i64: 2, 1, 128>}, {pipeline_mode = #tpu.pipeline_mode<synchronous>, transform_indices = @transform_5, window_bounds = array<i64: 128, 128>}, {pipeline_mode = #tpu.pipeline_mode<synchronous>, transform_indices = @transform_6, window_bounds = array<i64: 1, 128>}, {transform_indices = @transform_7, window_bounds = array<i64: 128, 128>}]} {
    %c0 = arith.constant 0 : index
    %c0_0 = arith.constant 0 : index
    %0 = vector.load %arg1[%c0, %c0_0] : memref<128x16xbf16, #tpu.memory_space<vmem>>, vector<128x16xbf16>
    %c0_1 = arith.constant 0 : index
    %c0_2 = arith.constant 0 : index
    %1 = vector.load %arg2[%c0_1, %c0_2] : memref<16x512xbf16, #tpu.memory_space<vmem>>, vector<16x512xbf16>
    %cst = arith.constant dense<0.000000e+00> : vector<128x512xf32>
    %2 = tpu.matmul %0, %1, %cst {dimension_numbers = #tpu.dot_dimension_numbers<[1], [0], [0], [1], [0, 0, 1, 1], [], []>} : vector<128x16xbf16>, vector<16x512xbf16>, vector<128x512xf32> -> vector<128x512xf32>
    %c0_3 = arith.constant 0 : index
    %c0_4 = arith.constant 0 : index
    %3 = vector.load %arg3[%c0_3, %c0_4] : memref<1x512xf32, #tpu.memory_space<vmem>>, vector<1x512xf32>
    %4 = vector.broadcast %3 : vector<1x512xf32> to vector<128x512xf32>
    %5 = arith.addf %2, %4 : vector<128x512xf32>
    %6 = vector.extract_strided_slice %5 {offsets = [0, 0], sizes = [128, 128], strides = [1, 1]} : vector<128x512xf32> to vector<128x128xf32>
    %cst_5 = arith.constant 0.000000e+00 : f32
    %7 = vector.broadcast %cst_5 : f32 to vector<128x128xf32>
    %8 = arith.maximumf %6, %7 : vector<128x128xf32>
    %9 = vector.extract_strided_slice %5 {offsets = [0, 128], sizes = [128, 128], strides = [1, 1]} : vector<128x512xf32> to vector<128x128xf32>
    %10 = arith.addf %8, %9 : vector<128x128xf32>
    %cst_6 = arith.constant 0.000000e+00 : f32
    %11 = vector.broadcast %cst_6 : f32 to vector<128x128xf32>
    %12 = arith.cmpf oge, %10, %11 : vector<128x128xf32>
    %cst_7 = arith.constant 0.00999999977 : f32
    %13 = vector.broadcast %cst_7 : f32 to vector<128x128xf32>
    %14 = arith.mulf %13, %10 : vector<128x128xf32>
    %15 = arith.select %12, %10, %14 : vector<128x128xi1>, vector<128x128xf32>
    %16 = arith.truncf %15 : vector<128x128xf32> to vector<128x128xbf16>
    %c0_8 = arith.constant 0 : index
    %c0_9 = arith.constant 0 : index
    %c0_10 = arith.constant 0 : index
    %17 = vector.load %arg4[%c0_8, %c0_9, %c0_10] : memref<2x128x128xbf16, #tpu.memory_space<vmem>>, vector<1x128x128xbf16>
    %18 = vector.shape_cast %17 : vector<1x128x128xbf16> to vector<128x128xbf16>
    %cst_11 = arith.constant dense<0.000000e+00> : vector<128x128xf32>
    %19 = tpu.matmul %16, %18, %cst_11 {dimension_numbers = #tpu.dot_dimension_numbers<[1], [0], [0], [1], [0, 0, 1, 1], [], []>} : vector<128x128xbf16>, vector<128x128xbf16>, vector<128x128xf32> -> vector<128x128xf32>
    %c0_12 = arith.constant 0 : index
    %c0_13 = arith.constant 0 : index
    %c0_14 = arith.constant 0 : index
    %20 = vector.load %arg5[%c0_12, %c0_13, %c0_14] : memref<2x1x128xf32, #tpu.memory_space<vmem>>, vector<1x1x128xf32>
    %21 = vector.shape_cast %20 : vector<1x1x128xf32> to vector<1x128xf32>
    %22 = vector.broadcast %21 : vector<1x128xf32> to vector<128x128xf32>
    %23 = arith.addf %19, %22 : vector<128x128xf32>
    %cst_15 = arith.constant 0.000000e+00 : f32
    %24 = vector.broadcast %cst_15 : f32 to vector<128x128xf32>
    %25 = arith.maximumf %23, %24 : vector<128x128xf32>
    %26 = vector.extract_strided_slice %5 {offsets = [0, 256], sizes = [128, 128], strides = [1, 1]} : vector<128x512xf32> to vector<128x128xf32>
    %27 = arith.addf %25, %26 : vector<128x128xf32>
    %cst_16 = arith.constant 0.000000e+00 : f32
    %28 = vector.broadcast %cst_16 : f32 to vector<128x128xf32>
    %29 = arith.cmpf oge, %27, %28 : vector<128x128xf32>
    %cst_17 = arith.constant 0.00999999977 : f32
    %30 = vector.broadcast %cst_17 : f32 to vector<128x128xf32>
    %31 = arith.mulf %30, %27 : vector<128x128xf32>
    %32 = arith.select %29, %27, %31 : vector<128x128xi1>, vector<128x128xf32>
    %33 = arith.truncf %32 : vector<128x128xf32> to vector<128x128xbf16>
    %c1 = arith.constant 1 : index
    %c0_18 = arith.constant 0 : index
    %c0_19 = arith.constant 0 : index
    %34 = vector.load %arg4[%c1, %c0_18, %c0_19] : memref<2x128x128xbf16, #tpu.memory_space<vmem>>, vector<1x128x128xbf16>
    %35 = vector.shape_cast %34 : vector<1x128x128xbf16> to vector<128x128xbf16>
    %cst_20 = arith.constant dense<0.000000e+00> : vector<128x128xf32>
    %36 = tpu.matmul %33, %35, %cst_20 {dimension_numbers = #tpu.dot_dimension_numbers<[1], [0], [0], [1], [0, 0, 1, 1], [], []>} : vector<128x128xbf16>, vector<128x128xbf16>, vector<128x128xf32> -> vector<128x128xf32>
    %c1_21 = arith.constant 1 : index
    %c0_22 = arith.constant 0 : index
    %c0_23 = arith.constant 0 : index
    %37 = vector.load %arg5[%c1_21, %c0_22, %c0_23] : memref<2x1x128xf32, #tpu.memory_space<vmem>>, vector<1x1x128xf32>
    %38 = vector.shape_cast %37 : vector<1x1x128xf32> to vector<1x128xf32>
    %39 = vector.broadcast %38 : vector<1x128xf32> to vector<128x128xf32>
    %40 = arith.addf %36, %39 : vector<128x128xf32>
    %cst_24 = arith.constant 0.000000e+00 : f32
    %41 = vector.broadcast %cst_24 : f32 to vector<128x128xf32>
    %42 = arith.maximumf %40, %41 : vector<128x128xf32>
    %43 = vector.extract_strided_slice %5 {offsets = [0, 384], sizes = [128, 128], strides = [1, 1]} : vector<128x512xf32> to vector<128x128xf32>
    %44 = arith.addf %42, %43 : vector<128x128xf32>
    %cst_25 = arith.constant 0.000000e+00 : f32
    %45 = vector.broadcast %cst_25 : f32 to vector<128x128xf32>
    %46 = arith.cmpf oge, %44, %45 : vector<128x128xf32>
    %cst_26 = arith.constant 0.00999999977 : f32
    %47 = vector.broadcast %cst_26 : f32 to vector<128x128xf32>
    %48 = arith.mulf %47, %44 : vector<128x128xf32>
    %49 = arith.select %46, %44, %48 : vector<128x128xi1>, vector<128x128xf32>
    %50 = arith.truncf %49 : vector<128x128xf32> to vector<128x128xbf16>
    %c0_27 = arith.constant 0 : index
    %c0_28 = arith.constant 0 : index
    %51 = vector.load %arg6[%c0_27, %c0_28] : memref<128x128xbf16, #tpu.memory_space<vmem>>, vector<128x128xbf16>
    %cst_29 = arith.constant dense<0.000000e+00> : vector<128x128xf32>
    %52 = tpu.matmul %50, %51, %cst_29 {dimension_numbers = #tpu.dot_dimension_numbers<[1], [0], [0], [1], [0, 0, 1, 1], [], []>} : vector<128x128xbf16>, vector<128x128xbf16>, vector<128x128xf32> -> vector<128x128xf32>
    %c0_30 = arith.constant 0 : index
    %c0_31 = arith.constant 0 : index
    %53 = vector.load %arg7[%c0_30, %c0_31] : memref<1x128xf32, #tpu.memory_space<vmem>>, vector<1x128xf32>
    %54 = vector.broadcast %53 : vector<1x128xf32> to vector<128x128xf32>
    %55 = arith.addf %52, %54 : vector<128x128xf32>
    %c0_32 = arith.constant 0 : index
    %c0_33 = arith.constant 0 : index
    %56 = vector.load %arg8[%c0_32, %c0_33] : memref<128x128xf32, #tpu.memory_space<vmem>>, vector<128x128xf32>
    tpu.vector_store %arg8[%c0_32, %c0_33], %55 {strides = array<i32>} : memref<128x128xf32, #tpu.memory_space<vmem>>, vector<128x128xf32>,
    return
  }
  func.func @transform_0(%arg0: i32) -> (i32, i32) {
    %c0_i32 = arith.constant 0 : i32
    %c0_i32_0 = arith.constant 0 : i32
    return %arg0, %c0_i32 : i32, i32
  }
  func.func @transform_1(%arg0: i32) -> (i32, i32) {
    %c0_i32 = arith.constant 0 : i32
    %c0_i32_0 = arith.constant 0 : i32
    %c0_i32_1 = arith.constant 0 : i32
    return %c0_i32, %c0_i32_0 : i32, i32
  }
  func.func @transform_2(%arg0: i32) -> (i32, i32) {
    %c0_i32 = arith.constant 0 : i32
    %c0_i32_0 = arith.constant 0 : i32
    %c0_i32_1 = arith.constant 0 : i32
    return %c0_i32, %c0_i32_0 : i32, i32
  }
  func.func @transform_3(%arg0: i32) -> (i32, i32, i32) {
    %c0_i32 = arith.constant 0 : i32
    %c0_i32_0 = arith.constant 0 : i32
    %c0_i32_1 = arith.constant 0 : i32
    %c0_i32_2 = arith.constant 0 : i32
    return %c0_i32, %c0_i32_0, %c0_i32_1 : i32, i32, i32
  }
  func.func @transform_4(%arg0: i32) -> (i32, i32, i32) {
    %c0_i32 = arith.constant 0 : i32
    %c0_i32_0 = arith.constant 0 : i32
    %c0_i32_1 = arith.constant 0 : i32
    %c0_i32_2 = arith.constant 0 : i32
    return %c0_i32, %c0_i32_0, %c0_i32_1 : i32, i32, i32
  }
  func.func @transform_5(%arg0: i32) -> (i32, i32) {
    %c0_i32 = arith.constant 0 : i32
    %c0_i32_0 = arith.constant 0 : i32
    %c0_i32_1 = arith.constant 0 : i32
    return %c0_i32, %c0_i32_0 : i32, i32
  }
  func.func @transform_6(%arg0: i32) -> (i32, i32) {
    %c0_i32 = arith.constant 0 : i32
    %c0_i32_0 = arith.constant 0 : i32
    %c0_i32_1 = arith.constant 0 : i32
    return %c0_i32, %c0_i32_0 : i32, i32
  }
  func.func @transform_7(%arg0: i32) -> (i32, i32) {
    %c0_i32 = arith.constant 0 : i32
    %c0_i32_0 = arith.constant 0 : i32
    return %arg0, %c0_i32 : i32, i32
  }
}

</mosaic_0001>

<llo_original>
// kernel: danet_forward.1
$region0: #{danet_forward.1}
  #allocation0 [shape = 'u32[]', space=smem, size = 0x4, offset = 0x4, fixed_abs, tag = 'smem constant byte address 0x4 - core index']
  #allocation1 [shape = 'u32[144,128]{1,0:T(1,128)}', space=vmem, size = 0x12000, scoped, tag = 'internal scratch']
  %s0 = inlined_call_operand.vmem [shape: bf16[256,16], index: 0, kind: input, shape index: {}]
  %s1 = inlined_call_operand.hbm [shape: bf16[16,512], index: 1, kind: input, shape index: {}]
  %s2 = inlined_call_operand.vmem [shape: f32[1,512], index: 2, kind: input, shape index: {}]
  %s3 = inlined_call_operand.vmem [shape: bf16[2,128,128], index: 3, kind: input, shape index: {}]
  %s4 = inlined_call_operand.vmem [shape: f32[2,1,128], index: 4, kind: input, shape index: {}]
  %s5 = inlined_call_operand.vmem [shape: bf16[128,128], index: 5, kind: input, shape index: {}]
  %s6 = inlined_call_operand.vmem [shape: f32[1,128], index: 6, kind: input, shape index: {}]
  %s7 = inlined_call_operand.vmem [shape: f32[256,128], index: 7, kind: output, shape index: {}]
  %s8 = sld [smem:[#allocation0]]
  $region65: #{danet_forward.1} parent=0
    _
  %s10 = ssub.s32 1, %s8
  %s11 = scalar_select 0, %s10, %s8
  $region1: #{danet_forward.1} parent=0
    #allocation2 [shape = 'u8[16384]{0}', space=vmem, size = 0x4000, scoped, tag = 'input window, operand 1, single buffered']
    #allocation3 [shape = 's32[2]{0}', space=sflag, size = 0x8, scoped, tag = 'scoped memory for danet_forward.1']
    %12 = vsyncpa [#allocation3], 0
    loop: start=0, step=1, limit=4
    $region2: #{danet_forward.1} parent=1 // loop_pre_header
      _
    $region3: #{danet_forward.1} parent=1 // loop_header
      %s14 = sphi 0, %s18
      %p15 = scmp.ge.s32.totalorder %s14, 4
      %s24 = sphi 0, %s26
      %s27 = sphi 0, %s24
      %s28 = sphi 0, %s27
      %s44 = sphi 0, %s28
      %s48 = sphi 0, %s48
      %s50 = sphi 0, %s48
      %s51 = sphi 0, %s50
      %s65 = sphi 0, %s51
      %s69 = sphi 0, %s69
      %s71 = sphi 0, %s69
      %s72 = sphi 0, %s71
      %s86 = sphi 0, %s72
      %s90 = sphi 0, %s90
      %s92 = sphi 0, %s90
      %s93 = sphi 0, %s92
      %s107 = sphi 0, %s93
      %s111 = sphi 0, %s111
      %s113 = sphi 0, %s111
      %s114 = sphi 0, %s113
      %s128 = sphi 0, %s114
      %s132 = sphi 0, %s132
      %s134 = sphi 0, %s132
      %s135 = sphi 0, %s134
      %s149 = sphi 0, %s135
      %s153 = sphi 0, %s153
      %s155 = sphi 0, %s153
      %s156 = sphi 0, %s155
      %s170 = sphi 0, %s156
      %s176 = sphi 0, %s178
      %s179 = sphi 0, %s176
      %s180 = sphi 0, %s179
      %s196 = sphi 0, %s180
    $region4: #{danet_forward.1} parent=1 // loop_header_branch
      %17 = sbr.rel (%p15) target = $region8
    $region5: #{danet_forward.1} parent=1 // loop_body
      %s19 = ssub.s32 %s14, 1
      %s20 = ssub.s32 %s14, 2
      %s21 = sadd.s32 %s14, 1
      %s22 = ssub.s32 %s14, %s21
      %p23 = scmp.eq.s32.totalorder %s22, 0
      %s25 = sadd.s32 %s24, 1
      %s26 = scalar_select %p23, %s24, %s25
      %p29 = pneg %p23
      %p30 = scmp.eq.s32.totalorder %s14, 1
      %p31 = por %p29, %p30
      %p32 = scmp.ne.s32.totalorder %s24, %s27
      %p33 = scmp.eq.s32.totalorder %s14, 0
      %p34 = por %p32, %p33
      %p35 = scmp.ne.s32.totalorder %s24, %s27
      %p36 = scmp.eq.s32.totalorder %s19, 1
      %p37 = por %p35, %p36
      %p38 = scmp.ne.s32.totalorder %s27, %s28
      %p39 = scmp.eq.s32.totalorder %s19, 0
      %p40 = por %p38, %p39
      %p41 = scmp.ne.s32.totalorder %s27, %s28
      %p42 = scmp.eq.s32.totalorder %s20, 1
      %p43 = por %p41, %p42
      %p45 = scmp.ne.s32.totalorder %s28, %s44
      %p46 = scmp.eq.s32.totalorder %s20, 0
      %p47 = por %p45, %p46
      %s49 = sadd.s32 %s48, 1
      %p52 = scmp.eq.s32.totalorder %s14, 1
      %p53 = scmp.ne.s32.totalorder %s48, %s50
      %p54 = scmp.eq.s32.totalorder %s14, 0
      %p55 = por %p53, %p54
      %p56 = scmp.ne.s32.totalorder %s48, %s50
      %p57 = scmp.eq.s32.totalorder %s19, 1
      %p58 = por %p56, %p57
      %p59 = scmp.ne.s32.totalorder %s50, %s51
      %p60 = scmp.eq.s32.totalorder %s19, 0
      %p61 = por %p59, %p60
      %p62 = scmp.ne.s32.totalorder %s50, %s51
      %p63 = scmp.eq.s32.totalorder %s20, 1
      %p64 = por %p62, %p63
      %p66 = scmp.ne.s32.totalorder %s51, %s65
      %p67 = scmp.eq.s32.totalorder %s20, 0
      %p68 = por %p66, %p67
      %s70 = sadd.s32 %s69, 1
      %p73 = scmp.eq.s32.totalorder %s14, 1
      %p74 = scmp.ne.s32.totalorder %s69, %s71
      %p75 = scmp.eq.s32.totalorder %s14, 0
      %p76 = por %p74, %p75
      %p77 = scmp.ne.s32.totalorder %s69, %s71
      %p78 = scmp.eq.s32.totalorder %s19, 1
      %p79 = por %p77, %p78
      %p80 = scmp.ne.s32.totalorder %s71, %s72
      %p81 = scmp.eq.s32.totalorder %s19, 0
      %p82 = por %p80, %p81
      %p83 = scmp.ne.s32.totalorder %s71, %s72
      %p84 = scmp.eq.s32.totalorder %s20, 1
      %p85 = por %p83, %p84
      %p87 = scmp.ne.s32.totalorder %s72, %s86
      %p88 = scmp.eq.s32.totalorder %s20, 0
      %p89 = por %p87, %p88
      %s91 = sadd.s32 %s90, 1
      %p94 = scmp.eq.s32.totalorder %s14, 1
      %p95 = scmp.ne.s32.totalorder %s90, %s92
      %p96 = scmp.eq.s32.totalorder %s14, 0
      %p97 = por %p95, %p96
      %p98 = scmp.ne.s32.totalorder %s90, %s92
      %p99 = scmp.eq.s32.totalorder %s19, 1
      %p100 = por %p98, %p99
      %p101 = scmp.ne.s32.totalorder %s92, %s93
      %p102 = scmp.eq.s32.totalorder %s19, 0
      %p103 = por %p101, %p102
      %p104 = scmp.ne.s32.totalorder %s92, %s93
      %p105 = scmp.eq.s32.totalorder %s20, 1
      %p106 = por %p104, %p105
      %p108 = scmp.ne.s32.totalorder %s93, %s107
      %p109 = scmp.eq.s32.totalorder %s20, 0
      %p110 = por %p108, %p109
      %s112 = sadd.s32 %s111, 1
      %p115 = scmp.eq.s32.totalorder %s14, 1
      %p116 = scmp.ne.s32.totalorder %s111, %s113
      %p117 = scmp.eq.s32.totalorder %s14, 0
      %p118 = por %p116, %p117
      %p119 = scmp.ne.s32.totalorder %s111, %s113
      %p120 = scmp.eq.s32.totalorder %s19, 1
      %p121 = por %p119, %p120
      %p122 = scmp.ne.s32.totalorder %s113, %s114
      %p123 = scmp.eq.s32.totalorder %s19, 0
      %p124 = por %p122, %p123
      %p125 = scmp.ne.s32.totalorder %s113, %s114
      %p126 = scmp.eq.s32.totalorder %s20, 1
      %p127 = por %p125, %p126
      %p129 = scmp.ne.s32.totalorder %s114, %s128
      %p130 = scmp.eq.s32.totalorder %s20, 0
      %p131 = por %p129, %p130
      %s133 = sadd.s32 %s132, 1
      %p136 = scmp.eq.s32.totalorder %s14, 1
      %p137 = scmp.ne.s32.totalorder %s132, %s134
      %p138 = scmp.eq.s32.totalorder %s14, 0
      %p139 = por %p137, %p138
      %p140 = scmp.ne.s32.totalorder %s132, %s134
      %p141 = scmp.eq.s32.totalorder %s19, 1
      %p142 = por %p140, %p141
      %p143 = scmp.ne.s32.totalorder %s134, %s135
      %p144 = scmp.eq.s32.totalorder %s19, 0
      %p145 = por %p143, %p144
      %p146 = scmp.ne.s32.totalorder %s134, %s135
      %p147 = scmp.eq.s32.totalorder %s20, 1
      %p148 = por %p146, %p147
      %p150 = scmp.ne.s32.totalorder %s135, %s149
      %p151 = scmp.eq.s32.totalorder %s20, 0
      %p152 = por %p150, %p151
      %s154 = sadd.s32 %s153, 1
      %p157 = scmp.eq.s32.totalorder %s14, 1
      %p158 = scmp.ne.s32.totalorder %s153, %s155
      %p159 = scmp.eq.s32.totalorder %s14, 0
      %p160 = por %p158, %p159
      %p161 = scmp.ne.s32.totalorder %s153, %s155
      %p162 = scmp.eq.s32.totalorder %s19, 1
      %p163 = por %p161, %p162
      %p164 = scmp.ne.s32.totalorder %s155, %s156
      %p165 = scmp.eq.s32.totalorder %s19, 0
      %p166 = por %p164, %p165
      %p167 = scmp.ne.s32.totalorder %s155, %s156
      %p168 = scmp.eq.s32.totalorder %s20, 1
      %p169 = por %p167, %p168
      %p171 = scmp.ne.s32.totalorder %s156, %s170
      %p172 = scmp.eq.s32.totalorder %s20, 0
      %p173 = por %p171, %p172
      %s174 = ssub.s32 %s14, %s21
      %p175 = scmp.eq.s32.totalorder %s174, 0
      %s177 = sadd.s32 %s176, 1
      %s178 = scalar_select %p175, %s176, %s177
      %p181 = pneg %p175
      %p182 = scmp.eq.s32.totalorder %s14, 1
      %p183 = por %p181, %p182
      %p184 = scmp.ne.s32.totalorder %s176, %s179
      %p185 = scmp.eq.s32.totalorder %s14, 0
      %p186 = por %p184, %p185
      %p187 = scmp.ne.s32.totalorder %s176, %s179
      %p188 = scmp.eq.s32.totalorder %s19, 1
      %p189 = por %p187, %p188
      %p190 = scmp.ne.s32.totalorder %s179, %s180
      %p191 = scmp.eq.s32.totalorder %s19, 0
      %p192 = por %p190, %p191
      %p193 = scmp.ne.s32.totalorder %s179, %s180
      %p194 = scmp.eq.s32.totalorder %s20, 1
      %p195 = por %p193, %p194
      %p197 = scmp.ne.s32.totalorder %s180, %s196
      %p198 = scmp.eq.s32.totalorder %s20, 0
      %p199 = por %p197, %p198
      %p200 = scmp.le.s32.totalorder 1, %s14
      %p201 = scmp.lt.s32.totalorder %s14, 3
      %p202 = pnand %p200, %p201
      %p203 = pneg %p202
      // Predicated region
      $region9: #{danet_forward.1} parent=5 // pred_check
        _
      $region10: #{danet_forward.1} parent=5 // pred_check_branch
        %205 = sbr.rel (%p202) target = $region12
      $region11: #{danet_forward.1} parent=5 // pred_region
        %s206 = ssub.s32 %s14, 1
        // Predicated region
        $region13: #{danet_forward.1} parent=11 // pred_check
          %p207 = pneg %p61
        $region14: #{danet_forward.1} parent=11 // pred_check_branch
          %209 = sbr.rel (%p207) target = $region16
        $region15: #{danet_forward.1} parent=11 // pred_region
          %s211 = ssub.s32 512, 512
          %212 = vsyncadd [#allocation3], %s211
          %s213 = sshll.u32 [#allocation2], 4
          %s214 = int_to_ptr.vmem [resolvable:$true] %s213
          %219 = dma.hbm_to_vmem [thread:$0]  %s1, 512, %s214, [#allocation3], 256, 256, 16
        $region16: #{danet_forward.1} parent=11 // pred_fallthru
          _
        // Predicated region
        $region17: #{danet_forward.1} parent=11 // pred_check
          %p220 = pneg %p82
        $region18: #{danet_forward.1} parent=11 // pred_check_branch
          %222 = sbr.rel (%p220) target = $region20
        $region19: #{danet_forward.1} parent=11 // pred_region
          _
        $region20: #{danet_forward.1} parent=11 // pred_fallthru
          _
        // Predicated region
        $region21: #{danet_forward.1} parent=11 // pred_check
          %p223 = pneg %p103
        $region22: #{danet_forward.1} parent=11 // pred_check_branch
          %225 = sbr.rel (%p223) target = $region24
        $region23: #{danet_forward.1} parent=11 // pred_region
          _
        $region24: #{danet_forward.1} parent=11 // pred_fallthru
          _
        // Predicated region
        $region25: #{danet_forward.1} parent=11 // pred_check
          %p226 = pneg %p124
        $region26: #{danet_forward.1} parent=11 // pred_check_branch
          %228 = sbr.rel (%p226) target = $region28
        $region27: #{danet_forward.1} parent=11 // pred_region
          _
        $region28: #{danet_forward.1} parent=11 // pred_fallthru
          _
        // Predicated region
        $region29: #{danet_forward.1} parent=11 // pred_check
          %p229 = pneg %p145
        $region30: #{danet_forward.1} parent=11 // pred_check_branch
          %231 = sbr.rel (%p229) target = $region32
        $region31: #{danet_forward.1} parent=11 // pred_region
          _
        $region32: #{danet_forward.1} parent=11 // pred_fallthru
          _
        // Predicated region
        $region33: #{danet_forward.1} parent=11 // pred_check
          %p232 = pneg %p166
        $region34: #{danet_forward.1} parent=11 // pred_check_branch
          %234 = sbr.rel (%p232) target = $region36
        $region35: #{danet_forward.1} parent=11 // pred_region
          _
        $region36: #{danet_forward.1} parent=11 // pred_fallthru
          _
      $region12: #{danet_forward.1} parent=5 // pred_fallthru
        _
      %p235 = scmp.lt.s32.totalorder %s14, 2
      // Predicated region
      $region37: #{danet_forward.1} parent=5 // pred_check
        %p236 = pneg %p235
      $region38: #{danet_forward.1} parent=5 // pred_check_branch
        %238 = sbr.rel (%p236) target = $region40
      $region39: #{danet_forward.1} parent=5 // pred_region
        // Predicated region
        $region41: #{danet_forward.1} parent=39 // pred_check
          %p239 = pneg %p34
        $region42: #{danet_forward.1} parent=39 // pred_check_branch
          %241 = sbr.rel (%p239) target = $region44
        $region43: #{danet_forward.1} parent=39 // pred_region
          %s242 = smul.u32 16, %s14
          %p243 = scmp.lt.s32.totalorder %s242, 31
          %s244 = scalar_select %p243, %s242, 31
          %s245 = smul.addr %s244, 4
          %s246 = scalar_lea.vmem %s0, %s245
          %s247 = smul.u32 16, %s14
        $region44: #{danet_forward.1} parent=39 // pred_fallthru
          _
      $region40: #{danet_forward.1} parent=5 // pred_fallthru
        _
      %p248 = scmp.le.s32.totalorder 1, %s14
      %p249 = scmp.lt.s32.totalorder %s14, 3
      %p250 = pnand %p248, %p249
      %p251 = pneg %p250
      // Predicated region
      $region45: #{danet_forward.1} parent=5 // pred_check
        _
      $region46: #{danet_forward.1} parent=5 // pred_check_branch
        %253 = sbr.rel (%p250) target = $region48
      $region47: #{danet_forward.1} parent=5 // pred_region
        %s254 = ssub.s32 %s14, 1
        // Predicated region
        $region49: #{danet_forward.1} parent=47 // pred_check
          %p255 = pneg %p61
        $region50: #{danet_forward.1} parent=47 // pred_check_branch
          %257 = sbr.rel (%p255) target = $region52
        $region51: #{danet_forward.1} parent=47 // pred_region
          %258 = dma.done [#allocation3], 512
        $region52: #{danet_forward.1} parent=47 // pred_fallthru
          _
        %s259 = smul.u32 16, %s19
        %p260 = scmp.lt.s32.totalorder %s259, 31
        %s261 = scalar_select %p260, %s259, 31
        %s262 = smul.addr %s261, 4
        %s263 = scalar_lea.vmem %s0, %s262
        %p264 = pneg %p40
        %p265 = pneg %p37
        %p266 = pneg %p61
        %p267 = pneg %p58
        %p268 = pneg %p82
        %p269 = pneg %p79
        %p270 = pneg %p103
        %p271 = pneg %p100
        %p272 = pneg %p124
        %p273 = pneg %p121
        %p274 = pneg %p145
        %p275 = pneg %p142
        %p276 = pneg %p166
        %p277 = pneg %p163
        %p278 = pneg %p192
        %p279 = pneg %p189
        %s280 = smul.u32 16, %s19
        %p281 = scmp.lt.s32.totalorder %s280, 31
        %s282 = scalar_select %p281, %s280, 31
        %s283 = smul.addr %s282, 8
        %s284 = scalar_lea.vmem %s7, %s283
        %s285 = smul.u32 16, %s19
        %p286 = scmp.lt.s32.totalorder %s285, 31
        %s287 = scalar_select %p286, %s285, 31
        %s288 = smul.addr %s287, 4
        %s289 = scalar_lea.vmem %s0, %s288
        %s290 = smul.u32 16, %s19
        %s291 = smul.u32 16, %s19
        %p292 = scmp.lt.s32.totalorder %s291, 31
        %s293 = scalar_select %p292, %s291, 31
        %s294 = smul.addr %s293, 8
        %s295 = scalar_lea.vmem %s7, %s294
        %s296 = smul.u32 16, %s19
        %v298 = vld [vmem:[%s289] sm:$0xf]
        %v299 = vld [vmem:[%s289 + $0x4] sm:$0xf]
        %v300 = vld [vmem:[%s289 + $0x8] sm:$0xf]
        %v301 = vld [vmem:[%s289 + $0xc] sm:$0xf]
        %v302 = vld [vmem:[%s289 + $0x10] sm:$0xf]
        %v303 = vld [vmem:[%s289 + $0x14] sm:$0xf]
        %v304 = vld [vmem:[%s289 + $0x18] sm:$0xf]
        %v305 = vld [vmem:[%s289 + $0x1c] sm:$0xf]
        %v306 = vld [vmem:[%s289 + $0x20] sm:$0xf]
        %v307 = vld [vmem:[%s289 + $0x24] sm:$0xf]
        %v308 = vld [vmem:[%s289 + $0x28] sm:$0xf]
        %v309 = vld [vmem:[%s289 + $0x2c] sm:$0xf]
        %v310 = vld [vmem:[%s289 + $0x30] sm:$0xf]
        %v311 = vld [vmem:[%s289 + $0x34] sm:$0xf]
        %v312 = vld [vmem:[%s289 + $0x38] sm:$0xf]
        %v313 = vld [vmem:[%s289 + $0x3c] sm:$0xf]
        %v314 = vld [vmem:[#allocation2] sm:$0xff]
        %v315 = vld [vmem:[#allocation2 + $0x8] sm:$0xff]
        %v316 = vld [vmem:[#allocation2 + $0x10] sm:$0xff]
        %v317 = vld [vmem:[#allocation2 + $0x18] sm:$0xff]
        %v318 = vld [vmem:[%s2] sm:$0xf]
        %v320 = vlaneseq
        %v321 = vshrl.u32 %v320, 7
        %v322 = vsub.s32 0, %v321
        %v323 = vrot.slane %v318, %v322
        %v324 = vlaneseq
        %v325 = vshrl.u32 %v324, 7
        %v326 = vsub.s32 1, %v325
        %v327 = vrot.slane %v318, %v326
        %v328 = vlaneseq
        %v329 = vshrl.u32 %v328, 7
        %v330 = vsub.s32 2, %v329
        %v331 = vrot.slane %v318, %v330
        %v332 = vlaneseq
        %v333 = vshrl.u32 %v332, 7
        %v334 = vsub.s32 3, %v333
        %v335 = vrot.slane %v318, %v334
        %v356 = vunpack.c.l.b16 %v298
        %v357 = vunpack.c.l.b16 %v299
        %v358 = vunpack.c.l.b16 %v300
        %v359 = vunpack.c.l.b16 %v301
        %v360 = vunpack.c.l.b16 %v302
        %v361 = vunpack.c.l.b16 %v303
        %v362 = vunpack.c.l.b16 %v304
        %v363 = vunpack.c.l.b16 %v305
        %v364 = vunpack.c.l.b16 %v306
        %v365 = vunpack.c.l.b16 %v307
        %v366 = vunpack.c.l.b16 %v308
        %v367 = vunpack.c.l.b16 %v309
        %v368 = vunpack.c.l.b16 %v310
        %v369 = vunpack.c.l.b16 %v311
        %v370 = vunpack.c.l.b16 %v312
        %v371 = vunpack.c.l.b16 %v313
        %v372 = vpack.c.b16 %v357, %v356
        %v373 = vpack.c.b16 %v359, %v358
        %v374 = vpack.c.b16 %v361, %v360
        %v375 = vpack.c.b16 %v363, %v362
        %v376 = vpack.c.b16 %v365, %v364
        %v377 = vpack.c.b16 %v367, %v366
        %v378 = vpack.c.b16 %v369, %v368
        %v379 = vpack.c.b16 %v371, %v370
        %v384 = vunpack.c.l.b16 %v314
        %v385 = vunpack.c.h.b16 %v314
        %v386 = vunpack.c.l.b16 %v315
        %v387 = vunpack.c.h.b16 %v315
        %v388 = vunpack.c.l.b16 %v316
        %v389 = vunpack.c.h.b16 %v316
        %v390 = vunpack.c.l.b16 %v317
        %v391 = vunpack.c.h.b16 %v317
        %v392 = vpack.c.b16 %v388, %v384
        %v393 = vpack.c.b16 %v389, %v385
        %v394 = vpack.c.b16 %v390, %v386
        %v395 = vpack.c.b16 %v391, %v387
        %vm400 = vcmask 130048
        %v402 = vsel %vm400, %v372, 0
        %v405 = vsel %vm400, %v373, 0
        %v408 = vsel %vm400, %v374, 0
        %v411 = vsel %vm400, %v375, 0
        %v414 = vsel %vm400, %v376, 0
        %v417 = vsel %vm400, %v377, 0
        %v420 = vsel %vm400, %v378, 0
        %v423 = vsel %vm400, %v379, 0
        %425 = vmatprep.subr.bf16.mxu0 0
        %426 = vmatpush1.bf16.msra.mxu0 0
        %427 = vmatprep.subr.bf16.mxu0 0
        %428 = vmatpush1.bf16.msra.mxu0 0
        %429 = vmatprep.subr.bf16.mxu0 0
        %430 = vmatpush1.bf16.msra.mxu0 0
        %431 = vmatprep.subr.bf16.mxu0 0
        %432 = vmatpush1.bf16.msra.mxu0 0
        %433 = vmatprep.subr.bf16.mxu0 0
        %434 = vmatpush1.bf16.msra.mxu0 0
        %435 = vmatprep.subr.bf16.mxu0 0
        %436 = vmatpush1.bf16.msra.mxu0 0
        %437 = vmatprep.subr.bf16.mxu0 0
        %438 = vmatpush1.bf16.msra.mxu0 0
        %439 = vmatprep.subr.bf16.mxu0 %v393
        %440 = vmatpush1.bf16.msra.mxu0 %v392
        %441 = vmatprep.subr.bf16.mxu0 0
        %442 = vmatpush2.bf16.msra.mxu0 0
        %443 = vmatprep.subr.bf16.mxu0 0
        %444 = vmatpush2.bf16.msra.mxu0 0
        %445 = vmatprep.subr.bf16.mxu0 0
        %446 = vmatpush2.bf16.msra.mxu0 0
        %447 = vmatprep.subr.bf16.mxu0 0
        %448 = vmatpush2.bf16.msra.mxu0 0
        %449 = vmatprep.subr.bf16.mxu0 0
        %450 = vmatpush2.bf16.msra.mxu0 0
        %451 = vmatprep.subr.bf16.mxu0 0
        %452 = vmatpush2.bf16.msra.mxu0 0
        %453 = vmatprep.subr.bf16.mxu0 0
        %454 = vmatpush2.bf16.msra.mxu0 0
        %455 = vmatprep.subr.bf16.mxu0 0
        %456 = vmatpush2.bf16.msra.mxu0 0
        %457 = vmatprep.mubr.bf16.mxu0 0
        %458 = vmatmul.mubr.bf16.gmra.mxu0 %v402
        %v459 = vpop.f32.mrf.mxu0
        %v460 = vadd.f32 %v323, %v459
        %v461 = vpop.f32.mrf.mxu0
        %v462 = vadd.f32 %v327, %v461
        %v463 = vpop.f32.mrf.mxu0
        %v464 = vadd.f32 %v323, %v463
        %v465 = vpop.f32.mrf.mxu0
        %v466 = vadd.f32 %v327, %v465
        %467 = vmatprep.mubr.bf16.mxu0 0
        %468 = vmatmul.mubr.bf16.gmra.mxu0 %v405
        %v469 = vpop.f32.mrf.mxu0
        %v470 = vadd.f32 %v323, %v469
        %v471 = vpop.f32.mrf.mxu0
        %v472 = vadd.f32 %v327, %v471
        %v473 = vpop.f32.mrf.mxu0
        %v474 = vadd.f32 %v323, %v473
        %v475 = vpop.f32.mrf.mxu0
        %v476 = vadd.f32 %v327, %v475
        %477 = vmatprep.mubr.bf16.mxu0 0
        %478 = vmatmul.mubr.bf16.gmra.mxu0 %v408
        %v479 = vpop.f32.mrf.mxu0
        %v480 = vadd.f32 %v323, %v479
        %v481 = vpop.f32.mrf.mxu0
        %v482 = vadd.f32 %v327, %v481
        %v483 = vpop.f32.mrf.mxu0
        %v484 = vadd.f32 %v323, %v483
        %v485 = vpop.f32.mrf.mxu0
        %v486 = vadd.f32 %v327, %v485
        %487 = vmatprep.mubr.bf16.mxu0 0
        %488 = vmatmul.mubr.bf16.gmra.mxu0 %v411
        %v489 = vpop.f32.mrf.mxu0
        %v490 = vadd.f32 %v323, %v489
        %v491 = vpop.f32.mrf.mxu0
        %v492 = vadd.f32 %v327, %v491
        %v493 = vpop.f32.mrf.mxu0
        %v494 = vadd.f32 %v323, %v493
        %v495 = vpop.f32.mrf.mxu0
        %v496 = vadd.f32 %v327, %v495
        %497 = vmatprep.mubr.bf16.mxu0 0
        %498 = vmatmul.mubr.bf16.gmra.mxu0 %v414
        %v499 = vpop.f32.mrf.mxu0
        %v500 = vadd.f32 %v323, %v499
        %v501 = vpop.f32.mrf.mxu0
        %v502 = vadd.f32 %v327, %v501
        %v503 = vpop.f32.mrf.mxu0
        %v504 = vadd.f32 %v323, %v503
        %v505 = vpop.f32.mrf.mxu0
        %v506 = vadd.f32 %v327, %v505
        %507 = vmatprep.mubr.bf16.mxu0 0
        %508 = vmatmul.mubr.bf16.gmra.mxu0 %v417
        %v509 = vpop.f32.mrf.mxu0
        %v510 = vadd.f32 %v323, %v509
        %v511 = vpop.f32.mrf.mxu0
        %v512 = vadd.f32 %v327, %v511
        %v513 = vpop.f32.mrf.mxu0
        %v514 = vadd.f32 %v323, %v513
        %v515 = vpop.f32.mrf.mxu0
        %v516 = vadd.f32 %v327, %v515
        %517 = vmatprep.mubr.bf16.mxu0 0
        %518 = vmatmul.mubr.bf16.gmra.mxu0 %v420
        %v519 = vpop.f32.mrf.mxu0
        %v520 = vadd.f32 %v323, %v519
        %v521 = vpop.f32.mrf.mxu0
        %v522 = vadd.f32 %v327, %v521
        %v523 = vpop.f32.mrf.mxu0
        %v524 = vadd.f32 %v323, %v523
        %v525 = vpop.f32.mrf.mxu0
        %v526 = vadd.f32 %v327, %v525
        %527 = vmatprep.mubr.bf16.mxu0 0
        %528 = vmatmul.mubr.bf16.gmra.mxu0 %v423
        %v529 = vpop.f32.mrf.mxu0
        %v530 = vadd.f32 %v323, %v529
        %v531 = vpop.f32.mrf.mxu0
        %v532 = vadd.f32 %v327, %v531
        %v533 = vpop.f32.mrf.mxu0
        %v534 = vadd.f32 %v323, %v533
        %v535 = vpop.f32.mrf.mxu0
        %v536 = vadd.f32 %v327, %v535
        %537 = vdwg.mxu0
        %538 = vmatprep.subr.bf16.mxu0 0
        %539 = vmatpush1.bf16.msra.mxu0 0
        %540 = vmatprep.subr.bf16.mxu0 0
        %541 = vmatpush1.bf16.msra.mxu0 0
        %542 = vmatprep.subr.bf16.mxu0 0
        %543 = vmatpush1.bf16.msra.mxu0 0
        %544 = vmatprep.subr.bf16.mxu0 0
        %545 = vmatpush1.bf16.msra.mxu0 0
        %546 = vmatprep.subr.bf16.mxu0 0
        %547 = vmatpush1.bf16.msra.mxu0 0
        %548 = vmatprep.subr.bf16.mxu0 0
        %549 = vmatpush1.bf16.msra.mxu0 0
        %550 = vmatprep.subr.bf16.mxu0 0
        %551 = vmatpush1.bf16.msra.mxu0 0
        %552 = vmatprep.subr.bf16.mxu0 %v395
        %553 = vmatpush1.bf16.msra.mxu0 %v394
        %554 = vmatprep.subr.bf16.mxu0 0
        %555 = vmatpush2.bf16.msra.mxu0 0
        %556 = vmatprep.subr.bf16.mxu0 0
        %557 = vmatpush2.bf16.msra.mxu0 0
        %558 = vmatprep.subr.bf16.mxu0 0
        %559 = vmatpush2.bf16.msra.mxu0 0
        %560 = vmatprep.subr.bf16.mxu0 0
        %561 = vmatpush2.bf16.msra.mxu0 0
        %562 = vmatprep.subr.bf16.mxu0 0
        %563 = vmatpush2.bf16.msra.mxu0 0
        %564 = vmatprep.subr.bf16.mxu0 0
        %565 = vmatpush2.bf16.msra.mxu0 0
        %566 = vmatprep.subr.bf16.mxu0 0
        %567 = vmatpush2.bf16.msra.mxu0 0
        %568 = vmatprep.subr.bf16.mxu0 0
        %569 = vmatpush2.bf16.msra.mxu0 0
        %570 = vmatprep.mubr.bf16.mxu0 0
        %571 = vmatmul.mubr.bf16.gmra.mxu0 %v402
        %v572 = vpop.f32.mrf.mxu0
        %v573 = vadd.f32 %v331, %v572
        %v574 = vpop.f32.mrf.mxu0
        %v575 = vadd.f32 %v335, %v574
        %v576 = vpop.f32.mrf.mxu0
        %v577 = vadd.f32 %v331, %v576
        %v578 = vpop.f32.mrf.mxu0
        %v579 = vadd.f32 %v335, %v578
        %580 = vmatprep.mubr.bf16.mxu0 0
        %581 = vmatmul.mubr.bf16.gmra.mxu0 %v405
        %v582 = vpop.f32.mrf.mxu0
        %v583 = vadd.f32 %v331, %v582
        %v584 = vpop.f32.mrf.mxu0
        %v585 = vadd.f32 %v335, %v584
        %v586 = vpop.f32.mrf.mxu0
        %v587 = vadd.f32 %v331, %v586
        %v588 = vpop.f32.mrf.mxu0
        %v589 = vadd.f32 %v335, %v588
        %590 = vmatprep.mubr.bf16.mxu0 0
        %591 = vmatmul.mubr.bf16.gmra.mxu0 %v408
        %v592 = vpop.f32.mrf.mxu0
        %v593 = vadd.f32 %v331, %v592
        %v594 = vpop.f32.mrf.mxu0
        %v595 = vadd.f32 %v335, %v594
        %v596 = vpop.f32.mrf.mxu0
        %v597 = vadd.f32 %v331, %v596
        %v598 = vpop.f32.mrf.mxu0
        %v599 = vadd.f32 %v335, %v598
        %600 = vmatprep.mubr.bf16.mxu0 0
        %601 = vmatmul.mubr.bf16.gmra.mxu0 %v411
        %v602 = vpop.f32.mrf.mxu0
        %v603 = vadd.f32 %v331, %v602
        %v604 = vpop.f32.mrf.mxu0
        %v605 = vadd.f32 %v335, %v604
        %v606 = vpop.f32.mrf.mxu0
        %v607 = vadd.f32 %v331, %v606
        %v608 = vpop.f32.mrf.mxu0
        %v609 = vadd.f32 %v335, %v608
        %610 = vmatprep.mubr.bf16.mxu0 0
        %611 = vmatmul.mubr.bf16.gmra.mxu0 %v414
        %v612 = vpop.f32.mrf.mxu0
        %v613 = vadd.f32 %v331, %v612
        %v614 = vpop.f32.mrf.mxu0
        %v615 = vadd.f32 %v335, %v614
        %v616 = vpop.f32.mrf.mxu0
        %v617 = vadd.f32 %v331, %v616
        %v618 = vpop.f32.mrf.mxu0
        %v619 = vadd.f32 %v335, %v618
        %620 = vmatprep.mubr.bf16.mxu0 0
        %621 = vmatmul.mubr.bf16.gmra.mxu0 %v417
        %v622 = vpop.f32.mrf.mxu0
        %v623 = vadd.f32 %v331, %v622
        %v624 = vpop.f32.mrf.mxu0
        %v625 = vadd.f32 %v335, %v624
        %v626 = vpop.f32.mrf.mxu0
        %v627 = vadd.f32 %v331, %v626
        %v628 = vpop.f32.mrf.mxu0
        %v629 = vadd.f32 %v335, %v628
        %630 = vmatprep.mubr.bf16.mxu0 0
        %631 = vmatmul.mubr.bf16.gmra.mxu0 %v420
        %v632 = vpop.f32.mrf.mxu0
        %v633 = vadd.f32 %v331, %v632
        %v634 = vpop.f32.mrf.mxu0
        %v635 = vadd.f32 %v335, %v634
        %v636 = vpop.f32.mrf.mxu0
        %v637 = vadd.f32 %v331, %v636
        %v638 = vpop.f32.mrf.mxu0
        %v639 = vadd.f32 %v335, %v638
        %640 = vmatprep.mubr.bf16.mxu0 0
        %641 = vmatmul.mubr.bf16.gmra.mxu0 %v423
        %v642 = vpop.f32.mrf.mxu0
        %v643 = vadd.f32 %v331, %v642
        %v644 = vpop.f32.mrf.mxu0
        %v645 = vadd.f32 %v335, %v644
        %v646 = vpop.f32.mrf.mxu0
        %v647 = vadd.f32 %v331, %v646
        %v648 = vpop.f32.mrf.mxu0
        %v649 = vadd.f32 %v335, %v648
        %650 = vdwg.mxu0
        %v651 = vmax.f32 %v460, 0.0
        %v652 = vmax.f32 %v464, 0.0
        %v653 = vmax.f32 %v470, 0.0
        %v654 = vmax.f32 %v474, 0.0
        %v655 = vmax.f32 %v480, 0.0
        %v656 = vmax.f32 %v484, 0.0
        %v657 = vmax.f32 %v490, 0.0
        %v658 = vmax.f32 %v494, 0.0
        %v659 = vmax.f32 %v500, 0.0
        %v660 = vmax.f32 %v504, 0.0
        %v661 = vmax.f32 %v510, 0.0
        %v662 = vmax.f32 %v514, 0.0
        %v663 = vmax.f32 %v520, 0.0
        %v664 = vmax.f32 %v524, 0.0
        %v665 = vmax.f32 %v530, 0.0
        %v666 = vmax.f32 %v534, 0.0
        %v667 = vadd.f32 %v651, %v462
        %v668 = vadd.f32 %v652, %v466
        %v669 = vadd.f32 %v653, %v472
        %v670 = vadd.f32 %v654, %v476
        %v671 = vadd.f32 %v655, %v482
        %v672 = vadd.f32 %v656, %v486
        %v673 = vadd.f32 %v657, %v492
        %v674 = vadd.f32 %v658, %v496
        %v675 = vadd.f32 %v659, %v502
        %v676 = vadd.f32 %v660, %v506
        %v677 = vadd.f32 %v661, %v512
        %v678 = vadd.f32 %v662, %v516
        %v679 = vadd.f32 %v663, %v522
        %v680 = vadd.f32 %v664, %v526
        %v681 = vadd.f32 %v665, %v532
        %v682 = vadd.f32 %v666, %v536
        %vm683 = vcmp.ge.f32.partialorder %v667, 0.0
        %vm684 = vcmp.ge.f32.partialorder %v668, 0.0
        %vm685 = vcmp.ge.f32.partialorder %v669, 0.0
        %vm686 = vcmp.ge.f32.partialorder %v670, 0.0
        %vm687 = vcmp.ge.f32.partialorder %v671, 0.0
        %vm688 = vcmp.ge.f32.partialorder %v672, 0.0
        %vm689 = vcmp.ge.f32.partialorder %v673, 0.0
        %vm690 = vcmp.ge.f32.partialorder %v674, 0.0
        %vm691 = vcmp.ge.f32.partialorder %v675, 0.0
        %vm692 = vcmp.ge.f32.partialorder %v676, 0.0
        %vm693 = vcmp.ge.f32.partialorder %v677, 0.0
        %vm694 = vcmp.ge.f32.partialorder %v678, 0.0
        %vm695 = vcmp.ge.f32.partialorder %v679, 0.0
        %vm696 = vcmp.ge.f32.partialorder %v680, 0.0
        %vm697 = vcmp.ge.f32.partialorder %v681, 0.0
        %vm698 = vcmp.ge.f32.partialorder %v682, 0.0
        %v699 = vmul.f32 %v667, 0.01
        %v700 = vmul.f32 %v668, 0.01
        %v701 = vmul.f32 %v669, 0.01
        %v702 = vmul.f32 %v670, 0.01
        %v703 = vmul.f32 %v671, 0.01
        %v704 = vmul.f32 %v672, 0.01
        %v705 = vmul.f32 %v673, 0.01
        %v706 = vmul.f32 %v674, 0.01
        %v707 = vmul.f32 %v675, 0.01
        %v708 = vmul.f32 %v676, 0.01
        %v709 = vmul.f32 %v677, 0.01
        %v710 = vmul.f32 %v678, 0.01
        %v711 = vmul.f32 %v679, 0.01
        %v712 = vmul.f32 %v680, 0.01
        %v713 = vmul.f32 %v681, 0.01
        %v714 = vmul.f32 %v682, 0.01
        %v715 = vsel %vm683, %v667, %v699
        %v716 = vsel %vm684, %v668, %v700
        %v717 = vsel %vm685, %v669, %v701
        %v718 = vsel %vm686, %v670, %v702
        %v719 = vsel %vm687, %v671, %v703
        %v720 = vsel %vm688, %v672, %v704
        %v721 = vsel %vm689, %v673, %v705
        %v722 = vsel %vm690, %v674, %v706
        %v723 = vsel %vm691, %v675, %v707
        %v724 = vsel %vm692, %v676, %v708
        %v725 = vsel %vm693, %v677, %v709
        %v726 = vsel %vm694, %v678, %v710
        %v727 = vsel %vm695, %v679, %v711
        %v728 = vsel %vm696, %v680, %v712
        %v729 = vsel %vm697, %v681, %v713
        %v730 = vsel %vm698, %v682, %v714
        %v731 = vpack.c.bf16 %v716, %v715
        %v732 = vpack.c.bf16 %v718, %v717
        %v733 = vpack.c.bf16 %v720, %v719
        %v734 = vpack.c.bf16 %v722, %v721
        %v735 = vpack.c.bf16 %v724, %v723
        %v736 = vpack.c.bf16 %v726, %v725
        %v737 = vpack.c.bf16 %v728, %v727
        %v738 = vpack.c.bf16 %v730, %v729
        %v739 = vld [vmem:[%s3] sm:$0xf]
        %v740 = vld [vmem:[%s3 + $0x4] sm:$0xf]
        %v741 = vld [vmem:[%s3 + $0x8] sm:$0xf]
        %v742 = vld [vmem:[%s3 + $0xc] sm:$0xf]
        %v743 = vld [vmem:[%s3 + $0x10] sm:$0xf]
        %v744 = vld [vmem:[%s3 + $0x14] sm:$0xf]
        %v745 = vld [vmem:[%s3 + $0x18] sm:$0xf]
        %v746 = vld [vmem:[%s3 + $0x1c] sm:$0xf]
        %v747 = vld [vmem:[%s3 + $0x20] sm:$0xf]
        %v748 = vld [vmem:[%s3 + $0x24] sm:$0xf]
        %v749 = vld [vmem:[%s3 + $0x28] sm:$0xf]
        %v750 = vld [vmem:[%s3 + $0x2c] sm:$0xf]
        %v751 = vld [vmem:[%s3 + $0x30] sm:$0xf]
        %v752 = vld [vmem:[%s3 + $0x34] sm:$0xf]
        %v753 = vld [vmem:[%s3 + $0x38] sm:$0xf]
        %v754 = vld [vmem:[%s3 + $0x3c] sm:$0xf]
        %v755 = vld [vmem:[%s4] sm:$0x1]
        %v757 = vlaneseq
        %v758 = vshrl.u32 %v757, 7
        %v759 = vsub.s32 0, %v758
        %v760 = vrot.slane %v755, %v759
        %v778 = vunpack.c.l.b16 %v739
        %v779 = vunpack.c.l.b16 %v740
        %v780 = vunpack.c.l.b16 %v741
        %v781 = vunpack.c.l.b16 %v742
        %v782 = vunpack.c.l.b16 %v743
        %v783 = vunpack.c.l.b16 %v744
        %v784 = vunpack.c.l.b16 %v745
        %v785 = vunpack.c.l.b16 %v746
        %v786 = vunpack.c.l.b16 %v747
        %v787 = vunpack.c.l.b16 %v748
        %v788 = vunpack.c.l.b16 %v749
        %v789 = vunpack.c.l.b16 %v750
        %v790 = vunpack.c.l.b16 %v751
        %v791 = vunpack.c.l.b16 %v752
        %v792 = vunpack.c.l.b16 %v753
        %v793 = vunpack.c.l.b16 %v754
        %v794 = vpack.c.b16 %v779, %v778
        %v795 = vpack.c.b16 %v781, %v780
        %v796 = vpack.c.b16 %v783, %v782
        %v797 = vpack.c.b16 %v785, %v784
        %v798 = vpack.c.b16 %v787, %v786
        %v799 = vpack.c.b16 %v789, %v788
        %v800 = vpack.c.b16 %v791, %v790
        %v801 = vpack.c.b16 %v793, %v792
        %810 = vmatprep.subr.bf16.mxu0 0
        %811 = vmatpush1.bf16.msra.mxu0 %v801
        %812 = vmatprep.subr.bf16.mxu0 0
        %813 = vmatpush1.bf16.msra.mxu0 %v800
        %814 = vmatprep.subr.bf16.mxu0 0
        %815 = vmatpush1.bf16.msra.mxu0 %v799
        %816 = vmatprep.subr.bf16.mxu0 0
        %817 = vmatpush1.bf16.msra.mxu0 %v798
        %818 = vmatprep.subr.bf16.mxu0 0
        %819 = vmatpush1.bf16.msra.mxu0 %v797
        %820 = vmatprep.subr.bf16.mxu0 0
        %821 = vmatpush1.bf16.msra.mxu0 %v796
        %822 = vmatprep.subr.bf16.mxu0 0
        %823 = vmatpush1.bf16.msra.mxu0 %v795
        %824 = vmatprep.subr.bf16.mxu0 0
        %825 = vmatpush1.bf16.msra.mxu0 %v794
        %826 = vmatprep.subr.bf16.mxu0 0
        %827 = vmatpush2.bf16.msra.mxu0 0
        %828 = vmatprep.subr.bf16.mxu0 0
        %829 = vmatpush2.bf16.msra.mxu0 0
        %830 = vmatprep.subr.bf16.mxu0 0
        %831 = vmatpush2.bf16.msra.mxu0 0
        %832 = vmatprep.subr.bf16.mxu0 0
        %833 = vmatpush2.bf16.msra.mxu0 0
        %834 = vmatprep.subr.bf16.mxu0 0
        %835 = vmatpush2.bf16.msra.mxu0 0
        %836 = vmatprep.subr.bf16.mxu0 0
        %837 = vmatpush2.bf16.msra.mxu0 0
        %838 = vmatprep.subr.bf16.mxu0 0
        %839 = vmatpush2.bf16.msra.mxu0 0
        %840 = vmatprep.subr.bf16.mxu0 0
        %841 = vmatpush2.bf16.msra.mxu0 0
        %842 = vmatprep.mubr.bf16.mxu0 0
        %843 = vmatmul.mubr.bf16.gmra.mxu0 %v731
        %v844 = vpop.f32.mrf.mxu0
        %v845 = vadd.f32 %v760, %v844
        %v846 = vpop.f32.mrf.mxu0
        %v847 = vpop.f32.mrf.mxu0
        %v848 = vadd.f32 %v760, %v847
        %v849 = vpop.f32.mrf.mxu0
        %850 = vmatprep.mubr.bf16.mxu0 0
        %851 = vmatmul.mubr.bf16.gmra.mxu0 %v732
        %v852 = vpop.f32.mrf.mxu0
        %v853 = vadd.f32 %v760, %v852
        %v854 = vpop.f32.mrf.mxu0
        %v855 = vpop.f32.mrf.mxu0
        %v856 = vadd.f32 %v760, %v855
        %v857 = vpop.f32.mrf.mxu0
        %858 = vmatprep.mubr.bf16.mxu0 0
        %859 = vmatmul.mubr.bf16.gmra.mxu0 %v733
        %v860 = vpop.f32.mrf.mxu0
        %v861 = vadd.f32 %v760, %v860
        %v862 = vpop.f32.mrf.mxu0
        %v863 = vpop.f32.mrf.mxu0
        %v864 = vadd.f32 %v760, %v863
        %v865 = vpop.f32.mrf.mxu0
        %866 = vmatprep.mubr.bf16.mxu0 0
        %867 = vmatmul.mubr.bf16.gmra.mxu0 %v734
        %v868 = vpop.f32.mrf.mxu0
        %v869 = vadd.f32 %v760, %v868
        %v870 = vpop.f32.mrf.mxu0
        %v871 = vpop.f32.mrf.mxu0
        %v872 = vadd.f32 %v760, %v871
        %v873 = vpop.f32.mrf.mxu0
        %874 = vmatprep.mubr.bf16.mxu0 0
        %875 = vmatmul.mubr.bf16.gmra.mxu0 %v735
        %v876 = vpop.f32.mrf.mxu0
        %v877 = vadd.f32 %v760, %v876
        %v878 = vpop.f32.mrf.mxu0
        %v879 = vpop.f32.mrf.mxu0
        %v880 = vadd.f32 %v760, %v879
        %v881 = vpop.f32.mrf.mxu0
        %882 = vmatprep.mubr.bf16.mxu0 0
        %883 = vmatmul.mubr.bf16.gmra.mxu0 %v736
        %v884 = vpop.f32.mrf.mxu0
        %v885 = vadd.f32 %v760, %v884
        %v886 = vpop.f32.mrf.mxu0
        %v887 = vpop.f32.mrf.mxu0
        %v888 = vadd.f32 %v760, %v887
        %v889 = vpop.f32.mrf.mxu0
        %890 = vmatprep.mubr.bf16.mxu0 0
        %891 = vmatmul.mubr.bf16.gmra.mxu0 %v737
        %v892 = vpop.f32.mrf.mxu0
        %v893 = vadd.f32 %v760, %v892
        %v894 = vpop.f32.mrf.mxu0
        %v895 = vpop.f32.mrf.mxu0
        %v896 = vadd.f32 %v760, %v895
        %v897 = vpop.f32.mrf.mxu0
        %898 = vmatprep.mubr.bf16.mxu0 0
        %899 = vmatmul.mubr.bf16.gmra.mxu0 %v738
        %v900 = vpop.f32.mrf.mxu0
        %v901 = vadd.f32 %v760, %v900
        %v902 = vpop.f32.mrf.mxu0
        %v903 = vpop.f32.mrf.mxu0
        %v904 = vadd.f32 %v760, %v903
        %v905 = vpop.f32.mrf.mxu0
        %906 = vdwg.mxu0
        %v907 = vmax.f32 %v845, 0.0
        %v908 = vmax.f32 %v848, 0.0
        %v909 = vmax.f32 %v853, 0.0
        %v910 = vmax.f32 %v856, 0.0
        %v911 = vmax.f32 %v861, 0.0
        %v912 = vmax.f32 %v864, 0.0
        %v913 = vmax.f32 %v869, 0.0
        %v914 = vmax.f32 %v872, 0.0
        %v915 = vmax.f32 %v877, 0.0
        %v916 = vmax.f32 %v880, 0.0
        %v917 = vmax.f32 %v885, 0.0
        %v918 = vmax.f32 %v888, 0.0
        %v919 = vmax.f32 %v893, 0.0
        %v920 = vmax.f32 %v896, 0.0
        %v921 = vmax.f32 %v901, 0.0
        %v922 = vmax.f32 %v904, 0.0
        %v923 = vadd.f32 %v907, %v573
        %v924 = vadd.f32 %v908, %v577
        %v925 = vadd.f32 %v909, %v583
        %v926 = vadd.f32 %v910, %v587
        %v927 = vadd.f32 %v911, %v593
        %v928 = vadd.f32 %v912, %v597
        %v929 = vadd.f32 %v913, %v603
        %v930 = vadd.f32 %v914, %v607
        %v931 = vadd.f32 %v915, %v613
        %v932 = vadd.f32 %v916, %v617
        %v933 = vadd.f32 %v917, %v623
        %v934 = vadd.f32 %v918, %v627
        %v935 = vadd.f32 %v919, %v633
        %v936 = vadd.f32 %v920, %v637
        %v937 = vadd.f32 %v921, %v643
        %v938 = vadd.f32 %v922, %v647
        %vm939 = vcmp.ge.f32.partialorder %v923, 0.0
        %vm940 = vcmp.ge.f32.partialorder %v924, 0.0
        %vm941 = vcmp.ge.f32.partialorder %v925, 0.0
        %vm942 = vcmp.ge.f32.partialorder %v926, 0.0
        %vm943 = vcmp.ge.f32.partialorder %v927, 0.0
        %vm944 = vcmp.ge.f32.partialorder %v928, 0.0
        %vm945 = vcmp.ge.f32.partialorder %v929, 0.0
        %vm946 = vcmp.ge.f32.partialorder %v930, 0.0
        %vm947 = vcmp.ge.f32.partialorder %v931, 0.0
        %vm948 = vcmp.ge.f32.partialorder %v932, 0.0
        %vm949 = vcmp.ge.f32.partialorder %v933, 0.0
        %vm950 = vcmp.ge.f32.partialorder %v934, 0.0
        %vm951 = vcmp.ge.f32.partialorder %v935, 0.0
        %vm952 = vcmp.ge.f32.partialorder %v936, 0.0
        %vm953 = vcmp.ge.f32.partialorder %v937, 0.0
        %vm954 = vcmp.ge.f32.partialorder %v938, 0.0
        %v955 = vmul.f32 %v923, 0.01
        %v956 = vmul.f32 %v924, 0.01
        %v957 = vmul.f32 %v925, 0.01
        %v958 = vmul.f32 %v926, 0.01
        %v959 = vmul.f32 %v927, 0.01
        %v960 = vmul.f32 %v928, 0.01
        %v961 = vmul.f32 %v929, 0.01
        %v962 = vmul.f32 %v930, 0.01
        %v963 = vmul.f32 %v931, 0.01
        %v964 = vmul.f32 %v932, 0.01
        %v965 = vmul.f32 %v933, 0.01
        %v966 = vmul.f32 %v934, 0.01
        %v967 = vmul.f32 %v935, 0.01
        %v968 = vmul.f32 %v936, 0.01
        %v969 = vmul.f32 %v937, 0.01
        %v970 = vmul.f32 %v938, 0.01
        %v971 = vsel %vm939, %v923, %v955
        %v972 = vsel %vm940, %v924, %v956
        %v973 = vsel %vm941, %v925, %v957
        %v974 = vsel %vm942, %v926, %v958
        %v975 = vsel %vm943, %v927, %v959
        %v976 = vsel %vm944, %v928, %v960
        %v977 = vsel %vm945, %v929, %v961
        %v978 = vsel %vm946, %v930, %v962
        %v979 = vsel %vm947, %v931, %v963
        %v980 = vsel %vm948, %v932, %v964
        %v981 = vsel %vm949, %v933, %v965
        %v982 = vsel %vm950, %v934, %v966
        %v983 = vsel %vm951, %v935, %v967
        %v984 = vsel %vm952, %v936, %v968
        %v985 = vsel %vm953, %v937, %v969
        %v986 = vsel %vm954, %v938, %v970
        %v987 = vpack.c.bf16 %v972, %v971
        %v988 = vpack.c.bf16 %v974, %v973
        %v989 = vpack.c.bf16 %v976, %v975
        %v990 = vpack.c.bf16 %v978, %v977
        %v991 = vpack.c.bf16 %v980, %v979
        %v992 = vpack.c.bf16 %v982, %v981
        %v993 = vpack.c.bf16 %v984, %v983
        %v994 = vpack.c.bf16 %v986, %v985
        %s995 = scalar_lea.vmem %s3, 64
        %v996 = vld [vmem:[%s995] sm:$0xf]
        %v997 = vld [vmem:[%s995 + $0x4] sm:$0xf]
        %v998 = vld [vmem:[%s995 + $0x8] sm:$0xf]
        %v999 = vld [vmem:[%s995 + $0xc] sm:$0xf]
        %v1000 = vld [vmem:[%s995 + $0x10] sm:$0xf]
        %v1001 = vld [vmem:[%s995 + $0x14] sm:$0xf]
        %v1002 = vld [vmem:[%s995 + $0x18] sm:$0xf]
        %v1003 = vld [vmem:[%s995 + $0x1c] sm:$0xf]
        %v1004 = vld [vmem:[%s995 + $0x20] sm:$0xf]
        %v1005 = vld [vmem:[%s995 + $0x24] sm:$0xf]
        %v1006 = vld [vmem:[%s995 + $0x28] sm:$0xf]
        %v1007 = vld [vmem:[%s995 + $0x2c] sm:$0xf]
        %v1008 = vld [vmem:[%s995 + $0x30] sm:$0xf]
        %v1009 = vld [vmem:[%s995 + $0x34] sm:$0xf]
        %v1010 = vld [vmem:[%s995 + $0x38] sm:$0xf]
        %v1011 = vld [vmem:[%s995 + $0x3c] sm:$0xf]
        %s1012 = scalar_lea.vmem %s4, 1
        %v1013 = vld [vmem:[%s1012] sm:$0x1]
        %v1015 = vlaneseq
        %v1016 = vshrl.u32 %v1015, 7
        %v1017 = vsub.s32 0, %v1016
        %v1018 = vrot.slane %v1013, %v1017
        %v1036 = vunpack.c.l.b16 %v996
        %v1037 = vunpack.c.l.b16 %v997
        %v1038 = vunpack.c.l.b16 %v998
        %v1039 = vunpack.c.l.b16 %v999
        %v1040 = vunpack.c.l.b16 %v1000
        %v1041 = vunpack.c.l.b16 %v1001
        %v1042 = vunpack.c.l.b16 %v1002
        %v1043 = vunpack.c.l.b16 %v1003
        %v1044 = vunpack.c.l.b16 %v1004
        %v1045 = vunpack.c.l.b16 %v1005
        %v1046 = vunpack.c.l.b16 %v1006
        %v1047 = vunpack.c.l.b16 %v1007
        %v1048 = vunpack.c.l.b16 %v1008
        %v1049 = vunpack.c.l.b16 %v1009
        %v1050 = vunpack.c.l.b16 %v1010
        %v1051 = vunpack.c.l.b16 %v1011
        %v1052 = vpack.c.b16 %v1037, %v1036
        %v1053 = vpack.c.b16 %v1039, %v1038
        %v1054 = vpack.c.b16 %v1041, %v1040
        %v1055 = vpack.c.b16 %v1043, %v1042
        %v1056 = vpack.c.b16 %v1045, %v1044
        %v1057 = vpack.c.b16 %v1047, %v1046
        %v1058 = vpack.c.b16 %v1049, %v1048
        %v1059 = vpack.c.b16 %v1051, %v1050
        %1068 = vmatprep.subr.bf16.mxu0 0
        %1069 = vmatpush1.bf16.msra.mxu0 %v1059
        %1070 = vmatprep.subr.bf16.mxu0 0
        %1071 = vmatpush1.bf16.msra.mxu0 %v1058
        %1072 = vmatprep.subr.bf16.mxu0 0
        %1073 = vmatpush1.bf16.msra.mxu0 %v1057
        %1074 = vmatprep.subr.bf16.mxu0 0
        %1075 = vmatpush1.bf16.msra.mxu0 %v1056
        %1076 = vmatprep.subr.bf16.mxu0 0
        %1077 = vmatpush1.bf16.msra.mxu0 %v1055
        %1078 = vmatprep.subr.bf16.mxu0 0
        %1079 = vmatpush1.bf16.msra.mxu0 %v1054
        %1080 = vmatprep.subr.bf16.mxu0 0
        %1081 = vmatpush1.bf16.msra.mxu0 %v1053
        %1082 = vmatprep.subr.bf16.mxu0 0
        %1083 = vmatpush1.bf16.msra.mxu0 %v1052
        %1084 = vmatprep.subr.bf16.mxu0 0
        %1085 = vmatpush2.bf16.msra.mxu0 0
        %1086 = vmatprep.subr.bf16.mxu0 0
        %1087 = vmatpush2.bf16.msra.mxu0 0
        %1088 = vmatprep.subr.bf16.mxu0 0
        %1089 = vmatpush2.bf16.msra.mxu0 0
        %1090 = vmatprep.subr.bf16.mxu0 0
        %1091 = vmatpush2.bf16.msra.mxu0 0
        %1092 = vmatprep.subr.bf16.mxu0 0
        %1093 = vmatpush2.bf16.msra.mxu0 0
        %1094 = vmatprep.subr.bf16.mxu0 0
        %1095 = vmatpush2.bf16.msra.mxu0 0
        %1096 = vmatprep.subr.bf16.mxu0 0
        %1097 = vmatpush2.bf16.msra.mxu0 0
        %1098 = vmatprep.subr.bf16.mxu0 0
        %1099 = vmatpush2.bf16.msra.mxu0 0
        %1100 = vmatprep.mubr.bf16.mxu0 0
        %1101 = vmatmul.mubr.bf16.gmra.mxu0 %v987
        %v1102 = vpop.f32.mrf.mxu0
        %v1103 = vadd.f32 %v1018, %v1102
        %v1104 = vpop.f32.mrf.mxu0
        %v1105 = vpop.f32.mrf.mxu0
        %v1106 = vadd.f32 %v1018, %v1105
        %v1107 = vpop.f32.mrf.mxu0
        %1108 = vmatprep.mubr.bf16.mxu0 0
        %1109 = vmatmul.mubr.bf16.gmra.mxu0 %v988
        %v1110 = vpop.f32.mrf.mxu0
        %v1111 = vadd.f32 %v1018, %v1110
        %v1112 = vpop.f32.mrf.mxu0
        %v1113 = vpop.f32.mrf.mxu0
        %v1114 = vadd.f32 %v1018, %v1113
        %v1115 = vpop.f32.mrf.mxu0
        %1116 = vmatprep.mubr.bf16.mxu0 0
        %1117 = vmatmul.mubr.bf16.gmra.mxu0 %v989
        %v1118 = vpop.f32.mrf.mxu0
        %v1119 = vadd.f32 %v1018, %v1118
        %v1120 = vpop.f32.mrf.mxu0
        %v1121 = vpop.f32.mrf.mxu0
        %v1122 = vadd.f32 %v1018, %v1121
        %v1123 = vpop.f32.mrf.mxu0
        %1124 = vmatprep.mubr.bf16.mxu0 0
        %1125 = vmatmul.mubr.bf16.gmra.mxu0 %v990
        %v1126 = vpop.f32.mrf.mxu0
        %v1127 = vadd.f32 %v1018, %v1126
        %v1128 = vpop.f32.mrf.mxu0
        %v1129 = vpop.f32.mrf.mxu0
        %v1130 = vadd.f32 %v1018, %v1129
        %v1131 = vpop.f32.mrf.mxu0
        %1132 = vmatprep.mubr.bf16.mxu0 0
        %1133 = vmatmul.mubr.bf16.gmra.mxu0 %v991
        %v1134 = vpop.f32.mrf.mxu0
        %v1135 = vadd.f32 %v1018, %v1134
        %v1136 = vpop.f32.mrf.mxu0
        %v1137 = vpop.f32.mrf.mxu0
        %v1138 = vadd.f32 %v1018, %v1137
        %v1139 = vpop.f32.mrf.mxu0
        %1140 = vmatprep.mubr.bf16.mxu0 0
        %1141 = vmatmul.mubr.bf16.gmra.mxu0 %v992
        %v1142 = vpop.f32.mrf.mxu0
        %v1143 = vadd.f32 %v1018, %v1142
        %v1144 = vpop.f32.mrf.mxu0
        %v1145 = vpop.f32.mrf.mxu0
        %v1146 = vadd.f32 %v1018, %v1145
        %v1147 = vpop.f32.mrf.mxu0
        %1148 = vmatprep.mubr.bf16.mxu0 0
        %1149 = vmatmul.mubr.bf16.gmra.mxu0 %v993
        %v1150 = vpop.f32.mrf.mxu0
        %v1151 = vadd.f32 %v1018, %v1150
        %v1152 = vpop.f32.mrf.mxu0
        %v1153 = vpop.f32.mrf.mxu0
        %v1154 = vadd.f32 %v1018, %v1153
        %v1155 = vpop.f32.mrf.mxu0
        %1156 = vmatprep.mubr.bf16.mxu0 0
        %1157 = vmatmul.mubr.bf16.gmra.mxu0 %v994
        %v1158 = vpop.f32.mrf.mxu0
        %v1159 = vadd.f32 %v1018, %v1158
        %v1160 = vpop.f32.mrf.mxu0
        %v1161 = vpop.f32.mrf.mxu0
        %v1162 = vadd.f32 %v1018, %v1161
        %v1163 = vpop.f32.mrf.mxu0
        %1164 = vdwg.mxu0
        %v1165 = vmax.f32 %v1103, 0.0
        %v1166 = vmax.f32 %v1106, 0.0
        %v1167 = vmax.f32 %v1111, 0.0
        %v1168 = vmax.f32 %v1114, 0.0
        %v1169 = vmax.f32 %v1119, 0.0
        %v1170 = vmax.f32 %v1122, 0.0
        %v1171 = vmax.f32 %v1127, 0.0
        %v1172 = vmax.f32 %v1130, 0.0
        %v1173 = vmax.f32 %v1135, 0.0
        %v1174 = vmax.f32 %v1138, 0.0
        %v1175 = vmax.f32 %v1143, 0.0
        %v1176 = vmax.f32 %v1146, 0.0
        %v1177 = vmax.f32 %v1151, 0.0
        %v1178 = vmax.f32 %v1154, 0.0
        %v1179 = vmax.f32 %v1159, 0.0
        %v1180 = vmax.f32 %v1162, 0.0
        %v1181 = vadd.f32 %v1165, %v575
        %v1182 = vadd.f32 %v1166, %v579
        %v1183 = vadd.f32 %v1167, %v585
        %v1184 = vadd.f32 %v1168, %v589
        %v1185 = vadd.f32 %v1169, %v595
        %v1186 = vadd.f32 %v1170, %v599
        %v1187 = vadd.f32 %v1171, %v605
        %v1188 = vadd.f32 %v1172, %v609
        %v1189 = vadd.f32 %v1173, %v615
        %v1190 = vadd.f32 %v1174, %v619
        %v1191 = vadd.f32 %v1175, %v625
        %v1192 = vadd.f32 %v1176, %v629
        %v1193 = vadd.f32 %v1177, %v635
        %v1194 = vadd.f32 %v1178, %v639
        %v1195 = vadd.f32 %v1179, %v645
        %v1196 = vadd.f32 %v1180, %v649
        %vm1197 = vcmp.ge.f32.partialorder %v1181, 0.0
        %vm1198 = vcmp.ge.f32.partialorder %v1182, 0.0
        %vm1199 = vcmp.ge.f32.partialorder %v1183, 0.0
        %vm1200 = vcmp.ge.f32.partialorder %v1184, 0.0
        %vm1201 = vcmp.ge.f32.partialorder %v1185, 0.0
        %vm1202 = vcmp.ge.f32.partialorder %v1186, 0.0
        %vm1203 = vcmp.ge.f32.partialorder %v1187, 0.0
        %vm1204 = vcmp.ge.f32.partialorder %v1188, 0.0
        %vm1205 = vcmp.ge.f32.partialorder %v1189, 0.0
        %vm1206 = vcmp.ge.f32.partialorder %v1190, 0.0
        %vm1207 = vcmp.ge.f32.partialorder %v1191, 0.0
        %vm1208 = vcmp.ge.f32.partialorder %v1192, 0.0
        %vm1209 = vcmp.ge.f32.partialorder %v1193, 0.0
        %vm1210 = vcmp.ge.f32.partialorder %v1194, 0.0
        %vm1211 = vcmp.ge.f32.partialorder %v1195, 0.0
        %vm1212 = vcmp.ge.f32.partialorder %v1196, 0.0
        %v1213 = vmul.f32 %v1181, 0.01
        %v1214 = vmul.f32 %v1182, 0.01
        %v1215 = vmul.f32 %v1183, 0.01
        %v1216 = vmul.f32 %v1184, 0.01
        %v1217 = vmul.f32 %v1185, 0.01
        %v1218 = vmul.f32 %v1186, 0.01
        %v1219 = vmul.f32 %v1187, 0.01
        %v1220 = vmul.f32 %v1188, 0.01
        %v1221 = vmul.f32 %v1189, 0.01
        %v1222 = vmul.f32 %v1190, 0.01
        %v1223 = vmul.f32 %v1191, 0.01
        %v1224 = vmul.f32 %v1192, 0.01
        %v1225 = vmul.f32 %v1193, 0.01
        %v1226 = vmul.f32 %v1194, 0.01
        %v1227 = vmul.f32 %v1195, 0.01
        %v1228 = vmul.f32 %v1196, 0.01
        %v1229 = vsel %vm1197, %v1181, %v1213
        %v1230 = vsel %vm1198, %v1182, %v1214
        %v1231 = vsel %vm1199, %v1183, %v1215
        %v1232 = vsel %vm1200, %v1184, %v1216
        %v1233 = vsel %vm1201, %v1185, %v1217
        %v1234 = vsel %vm1202, %v1186, %v1218
        %v1235 = vsel %vm1203, %v1187, %v1219
        %v1236 = vsel %vm1204, %v1188, %v1220
        %v1237 = vsel %vm1205, %v1189, %v1221
        %v1238 = vsel %vm1206, %v1190, %v1222
        %v1239 = vsel %vm1207, %v1191, %v1223
        %v1240 = vsel %vm1208, %v1192, %v1224
        %v1241 = vsel %vm1209, %v1193, %v1225
        %v1242 = vsel %vm1210, %v1194, %v1226
        %v1243 = vsel %vm1211, %v1195, %v1227
        %v1244 = vsel %vm1212, %v1196, %v1228
        %v1245 = vpack.c.bf16 %v1230, %v1229
        %v1246 = vpack.c.bf16 %v1232, %v1231
        %v1247 = vpack.c.bf16 %v1234, %v1233
        %v1248 = vpack.c.bf16 %v1236, %v1235
        %v1249 = vpack.c.bf16 %v1238, %v1237
        %v1250 = vpack.c.bf16 %v1240, %v1239
        %v1251 = vpack.c.bf16 %v1242, %v1241
        %v1252 = vpack.c.bf16 %v1244, %v1243
        %v1253 = vld [vmem:[%s5] sm:$0xf]
        %v1254 = vld [vmem:[%s5 + $0x4] sm:$0xf]
        %v1255 = vld [vmem:[%s5 + $0x8] sm:$0xf]
        %v1256 = vld [vmem:[%s5 + $0xc] sm:$0xf]
        %v1257 = vld [vmem:[%s5 + $0x10] sm:$0xf]
        %v1258 = vld [vmem:[%s5 + $0x14] sm:$0xf]
        %v1259 = vld [vmem:[%s5 + $0x18] sm:$0xf]
        %v1260 = vld [vmem:[%s5 + $0x1c] sm:$0xf]
        %v1261 = vld [vmem:[%s5 + $0x20] sm:$0xf]
        %v1262 = vld [vmem:[%s5 + $0x24] sm:$0xf]
        %v1263 = vld [vmem:[%s5 + $0x28] sm:$0xf]
        %v1264 = vld [vmem:[%s5 + $0x2c] sm:$0xf]
        %v1265 = vld [vmem:[%s5 + $0x30] sm:$0xf]
        %v1266 = vld [vmem:[%s5 + $0x34] sm:$0xf]
        %v1267 = vld [vmem:[%s5 + $0x38] sm:$0xf]
        %v1268 = vld [vmem:[%s5 + $0x3c] sm:$0xf]
        %v1269 = vld [vmem:[%s6] sm:$0x1]
        %v1271 = vlaneseq
        %v1272 = vshrl.u32 %v1271, 7
        %v1273 = vsub.s32 0, %v1272
        %v1274 = vrot.slane %v1269, %v1273
        %v1292 = vunpack.c.l.b16 %v1253
        %v1293 = vunpack.c.l.b16 %v1254
        %v1294 = vunpack.c.l.b16 %v1255
        %v1295 = vunpack.c.l.b16 %v1256
        %v1296 = vunpack.c.l.b16 %v1257
        %v1297 = vunpack.c.l.b16 %v1258
        %v1298 = vunpack.c.l.b16 %v1259
        %v1299 = vunpack.c.l.b16 %v1260
        %v1300 = vunpack.c.l.b16 %v1261
        %v1301 = vunpack.c.l.b16 %v1262
        %v1302 = vunpack.c.l.b16 %v1263
        %v1303 = vunpack.c.l.b16 %v1264
        %v1304 = vunpack.c.l.b16 %v1265
        %v1305 = vunpack.c.l.b16 %v1266
        %v1306 = vunpack.c.l.b16 %v1267
        %v1307 = vunpack.c.l.b16 %v1268
        %v1308 = vpack.c.b16 %v1293, %v1292
        %v1309 = vpack.c.b16 %v1295, %v1294
        %v1310 = vpack.c.b16 %v1297, %v1296
        %v1311 = vpack.c.b16 %v1299, %v1298
        %v1312 = vpack.c.b16 %v1301, %v1300
        %v1313 = vpack.c.b16 %v1303, %v1302
        %v1314 = vpack.c.b16 %v1305, %v1304
        %v1315 = vpack.c.b16 %v1307, %v1306
        %1324 = vmatprep.subr.bf16.mxu0 0
        %1325 = vmatpush1.bf16.msra.mxu0 %v1315
        %1326 = vmatprep.subr.bf16.mxu0 0
        %1327 = vmatpush1.bf16.msra.mxu0 %v1314
        %1328 = vmatprep.subr.bf16.mxu0 0
        %1329 = vmatpush1.bf16.msra.mxu0 %v1313
        %1330 = vmatprep.subr.bf16.mxu0 0
        %1331 = vmatpush1.bf16.msra.mxu0 %v1312
        %1332 = vmatprep.subr.bf16.mxu0 0
        %1333 = vmatpush1.bf16.msra.mxu0 %v1311
        %1334 = vmatprep.subr.bf16.mxu0 0
        %1335 = vmatpush1.bf16.msra.mxu0 %v1310
        %1336 = vmatprep.subr.bf16.mxu0 0
        %1337 = vmatpush1.bf16.msra.mxu0 %v1309
        %1338 = vmatprep.subr.bf16.mxu0 0
        %1339 = vmatpush1.bf16.msra.mxu0 %v1308
        %1340 = vmatprep.subr.bf16.mxu0 0
        %1341 = vmatpush2.bf16.msra.mxu0 0
        %1342 = vmatprep.subr.bf16.mxu0 0
        %1343 = vmatpush2.bf16.msra.mxu0 0
        %1344 = vmatprep.subr.bf16.mxu0 0
        %1345 = vmatpush2.bf16.msra.mxu0 0
        %1346 = vmatprep.subr.bf16.mxu0 0
        %1347 = vmatpush2.bf16.msra.mxu0 0
        %1348 = vmatprep.subr.bf16.mxu0 0
        %1349 = vmatpush2.bf16.msra.mxu0 0
        %1350 = vmatprep.subr.bf16.mxu0 0
        %1351 = vmatpush2.bf16.msra.mxu0 0
        %1352 = vmatprep.subr.bf16.mxu0 0
        %1353 = vmatpush2.bf16.msra.mxu0 0
        %1354 = vmatprep.subr.bf16.mxu0 0
        %1355 = vmatpush2.bf16.msra.mxu0 0
        %1356 = vmatprep.mubr.bf16.mxu0 0
        %1357 = vmatmul.mubr.bf16.gmra.mxu0 %v1245
        %v1358 = vpop.f32.mrf.mxu0
        %v1359 = vadd.f32 %v1274, %v1358
        %v1360 = vpop.f32.mrf.mxu0
        %v1361 = vpop.f32.mrf.mxu0
        %v1362 = vadd.f32 %v1274, %v1361
        %v1363 = vpop.f32.mrf.mxu0
        %1364 = vmatprep.mubr.bf16.mxu0 0
        %1365 = vmatmul.mubr.bf16.gmra.mxu0 %v1246
        %v1366 = vpop.f32.mrf.mxu0
        %v1367 = vadd.f32 %v1274, %v1366
        %v1368 = vpop.f32.mrf.mxu0
        %v1369 = vpop.f32.mrf.mxu0
        %v1370 = vadd.f32 %v1274, %v1369
        %v1371 = vpop.f32.mrf.mxu0
        %1372 = vmatprep.mubr.bf16.mxu0 0
        %1373 = vmatmul.mubr.bf16.gmra.mxu0 %v1247
        %v1374 = vpop.f32.mrf.mxu0
        %v1375 = vadd.f32 %v1274, %v1374
        %v1376 = vpop.f32.mrf.mxu0
        %v1377 = vpop.f32.mrf.mxu0
        %v1378 = vadd.f32 %v1274, %v1377
        %v1379 = vpop.f32.mrf.mxu0
        %1380 = vmatprep.mubr.bf16.mxu0 0
        %1381 = vmatmul.mubr.bf16.gmra.mxu0 %v1248
        %v1382 = vpop.f32.mrf.mxu0
        %v1383 = vadd.f32 %v1274, %v1382
        %v1384 = vpop.f32.mrf.mxu0
        %v1385 = vpop.f32.mrf.mxu0
        %v1386 = vadd.f32 %v1274, %v1385
        %v1387 = vpop.f32.mrf.mxu0
        %1388 = vmatprep.mubr.bf16.mxu0 0
        %1389 = vmatmul.mubr.bf16.gmra.mxu0 %v1249
        %v1390 = vpop.f32.mrf.mxu0
        %v1391 = vadd.f32 %v1274, %v1390
        %v1392 = vpop.f32.mrf.mxu0
        %v1393 = vpop.f32.mrf.mxu0
        %v1394 = vadd.f32 %v1274, %v1393
        %v1395 = vpop.f32.mrf.mxu0
        %1396 = vmatprep.mubr.bf16.mxu0 0
        %1397 = vmatmul.mubr.bf16.gmra.mxu0 %v1250
        %v1398 = vpop.f32.mrf.mxu0
        %v1399 = vadd.f32 %v1274, %v1398
        %v1400 = vpop.f32.mrf.mxu0
        %v1401 = vpop.f32.mrf.mxu0
        %v1402 = vadd.f32 %v1274, %v1401
        %v1403 = vpop.f32.mrf.mxu0
        %1404 = vmatprep.mubr.bf16.mxu0 0
        %1405 = vmatmul.mubr.bf16.gmra.mxu0 %v1251
        %v1406 = vpop.f32.mrf.mxu0
        %v1407 = vadd.f32 %v1274, %v1406
        %v1408 = vpop.f32.mrf.mxu0
        %v1409 = vpop.f32.mrf.mxu0
        %v1410 = vadd.f32 %v1274, %v1409
        %v1411 = vpop.f32.mrf.mxu0
        %1412 = vmatprep.mubr.bf16.mxu0 0
        %1413 = vmatmul.mubr.bf16.gmra.mxu0 %v1252
        %v1414 = vpop.f32.mrf.mxu0
        %v1415 = vadd.f32 %v1274, %v1414
        %v1416 = vpop.f32.mrf.mxu0
        %v1417 = vpop.f32.mrf.mxu0
        %v1418 = vadd.f32 %v1274, %v1417
        %v1419 = vpop.f32.mrf.mxu0
        %1420 = vdwg.mxu0
        %1421 = vst [vmem:[%s295] sm:$0xff] %v1359
        %1422 = vst [vmem:[%s295 + $0x8] sm:$0xff] %v1362
        %1423 = vst [vmem:[%s295 + $0x10] sm:$0xff] %v1367
        %1424 = vst [vmem:[%s295 + $0x18] sm:$0xff] %v1370
        %1425 = vst [vmem:[%s295 + $0x20] sm:$0xff] %v1375
        %1426 = vst [vmem:[%s295 + $0x28] sm:$0xff] %v1378
        %1427 = vst [vmem:[%s295 + $0x30] sm:$0xff] %v1383
        %1428 = vst [vmem:[%s295 + $0x38] sm:$0xff] %v1386
        %1429 = vst [vmem:[%s295 + $0x40] sm:$0xff] %v1391
        %1430 = vst [vmem:[%s295 + $0x48] sm:$0xff] %v1394
        %1431 = vst [vmem:[%s295 + $0x50] sm:$0xff] %v1399
        %1432 = vst [vmem:[%s295 + $0x58] sm:$0xff] %v1402
        %1433 = vst [vmem:[%s295 + $0x60] sm:$0xff] %v1407
        %1434 = vst [vmem:[%s295 + $0x68] sm:$0xff] %v1410
        %1435 = vst [vmem:[%s295 + $0x70] sm:$0xff] %v1415
        %1436 = vst [vmem:[%s295 + $0x78] sm:$0xff] %v1418
        %s1437 = smul.u32 16, %s19
        %p1438 = scmp.lt.s32.totalorder %s1437, 31
        %s1439 = scalar_select %p1438, %s1437, 31
        %s1440 = smul.addr %s1439, 8
        %s1441 = scalar_lea.vmem %s7, %s1440
        // Predicated region
        $region53: #{danet_forward.1} parent=47 // pred_check
          %p1442 = pneg %p189
        $region54: #{danet_forward.1} parent=47 // pred_check_branch
          %1444 = sbr.rel (%p1442) target = $region56
        $region55: #{danet_forward.1} parent=47 // pred_region
          %s1445 = smul.u32 16, %s19
        $region56: #{danet_forward.1} parent=47 // pred_fallthru
          _
      $region48: #{danet_forward.1} parent=5 // pred_fallthru
        _
      %p1446 = scmp.le.s32.totalorder 2, %s14
      // Predicated region
      $region57: #{danet_forward.1} parent=5 // pred_check
        %p1447 = pneg %p1446
      $region58: #{danet_forward.1} parent=5 // pred_check_branch
        %1449 = sbr.rel (%p1447) target = $region60
      $region59: #{danet_forward.1} parent=5 // pred_region
        %s1450 = ssub.s32 %s14, 2
        // Predicated region
        $region61: #{danet_forward.1} parent=59 // pred_check
          %p1451 = pneg %p195
        $region62: #{danet_forward.1} parent=59 // pred_check_branch
          %1453 = sbr.rel (%p1451) target = $region64
        $region63: #{danet_forward.1} parent=59 // pred_region
          %s1454 = smul.u32 16, %s20
          %p1455 = scmp.lt.s32.totalorder %s1454, 31
          %s1456 = scalar_select %p1455, %s1454, 31
          %s1457 = smul.addr %s1456, 8
          %s1458 = scalar_lea.vmem %s7, %s1457
        $region64: #{danet_forward.1} parent=59 // pred_fallthru
          _
      $region60: #{danet_forward.1} parent=5 // pred_fallthru
        _
    $region6: #{danet_forward.1} parent=1 // loop_footer
      %s18 = sadd.s32 1, %s14
    $region7: #{danet_forward.1} parent=1 // loop_footer_branch
      %13 = sbr.rel target = $region3
    $region8: #{danet_forward.1} parent=1 // loop_exit
      _
    %1459 = vsyncpa [#allocation3], 1
    %s1460 = scalar_lea.sflag [#allocation3], 1
    %1461 = vsyncpa %s1460, 1

</llo_original>
